<compile_context>
chip_gen: v7x
topology: tpu7x:2x2x1
jax: 0.10.0
libtpu: 0.0.40
codegen_flags: <defaults>
</compile_context>

<pallas_src>
import functools

import numpy as np

import jax
import jax.numpy as jnp
from jax import lax
from jax.experimental import pallas as pl
from jax.experimental.pallas import tpu as pltpu


def conv_bn_kernel(xf_ref, w_ref, mask_ref, params_ref, o_ref, *,
                   cin, tap_offsets, base, p_acc, m_valid, eps):
    """Fused conv (KH*KW shifted matmuls) + training-mode BatchNorm.

    xf_ref:     (Cin, LIN)      zero-padded, flattened (N, Hp, Wp) input
    w_ref:      (Cout, KH*KW*Cin)  per-tap (Cout, Cin) weight blocks, tap-major
    mask_ref:   (1, P_ACC)      1.0 at the N*Ho*Wo valid output lanes, else 0.0
    params_ref: (Cout, 2)       column 0 = gamma, column 1 = beta
    o_ref:      (Cout, P_ACC)   normalized output at all padded-grid positions
    """
    w = w_ref[...]                                           # (Cout, K)

    # Conv hot path: 9 shifted matmuls accumulating into one f32 accumulator.
    # Each shift is a static lane-window load of the flattened padded input,
    # so no im2col patches tensor is ever materialized anywhere.
    acc = None
    for t, d in enumerate(tap_offsets):
        start = base + d                                     # static Python int
        x_shift = xf_ref[:, start:start + p_acc]             # (Cin, P_ACC)
        w_tap = w[:, t * cin:(t + 1) * cin]                  # (Cout, Cin)
        part = jnp.dot(w_tap, x_shift,
                       preferred_element_type=jnp.float32)   # MXU, f32 accum
        acc = part if acc is None else acc + part            # (Cout, P_ACC) f32

    # Conv bias omitted: a per-channel constant cancels exactly under the
    # training-mode BN mean subtraction below.

    # BatchNorm (training mode): per-channel stats over the M = N*Ho*Wo valid
    # positions (mask zeroes halo / lane-padding columns).  One pass:
    # sum + sum-of-squares -> mean / biased variance (matches PyTorch BN).
    mask = mask_ref[...]                                     # (1, P_ACC) f32
    inv_m = 1.0 / m_valid
    am = acc * mask
    s1 = jnp.sum(am, axis=1, keepdims=True)                  # (Cout, 1)
    s2 = jnp.sum(am * acc, axis=1, keepdims=True)            # (Cout, 1)
    mean = s1 * inv_m
    var = s2 * inv_m - mean * mean                           # biased variance
    inv = lax.rsqrt(var + eps)

    gamma = params_ref[:, 0:1]                               # (Cout, 1)
    beta = params_ref[:, 1:2]                                # (Cout, 1)
    scale = inv * gamma
    shift = beta - mean * scale                              # fold mean into affine
    o_ref[...] = (acc * scale + shift).astype(o_ref.dtype)   # one FMA per element


def bn_model_forward(x_nchw, w_oihw, b, gamma, beta, *,
                     eps=1e-5, padding=1, mxu_dtype=jnp.bfloat16):
    """Forward of BNModel: bn(conv(x)).  NCHW in/out like PyTorch; stride 1.

    NOTE: BN runs in training mode (batch statistics), which is why the conv
    bias may be dropped (it cancels exactly under batch-mean subtraction).
    In eval mode (running stats) this would NOT hold.
    """
    N, Cin, H, W = x_nchw.shape
    Cout, Cin_w, KH, KW = w_oihw.shape
    assert Cin_w == Cin
    del b  # cancels exactly under training-mode BN

    Hp, Wp = H + 2 * padding, W + 2 * padding
    Ho, Wo = Hp - KH + 1, Wp - KW + 1        # stride 1
    L = Hp * Wp                              # flattened padded image size
    total = N * L

    LANE = 128
    p_acc = -(-total // LANE) * LANE         # accumulator lane width (mult of 128)
    tap_offsets = [(kh - padding) * Wp + (kw - padding)
                   for kh in range(KH) for kw in range(KW)]
    halo_l = max(1, -min(tap_offsets))
    halo_r = max(1, max(tap_offsets))
    base = -(-halo_l // LANE) * LANE         # 128-aligned left margin >= |min offset|
    lin = base + p_acc + (-(-halo_r // LANE) * LANE)

    # --- tiny layout glue (allow_input_fusion lets XLA fold it into the call) ---
    # NCHW -> (Cin, N, Hp, Wp) zero-padded -> flattened (Cin, LIN) with a halo
    # margin so every shifted conv tap is an in-range static lane window.
    xq = jnp.transpose(x_nchw, (1, 0, 2, 3)).astype(jnp.float32)
    xq = jnp.pad(xq, ((0, 0), (0, 0), (padding, padding), (padding, padding)))
    xf = jnp.pad(xq.reshape(Cin, total), ((0, 0), (base, lin - base - total)))
    xf = xf.astype(mxu_dtype)

    # Weights (Cout,Cin,KH,KW) -> (Cout, KH*KW*Cin), tap-major (kh, kw, cin).
    w_t = jnp.transpose(w_oihw, (0, 2, 3, 1)).reshape(Cout, KH * KW * Cin)
    w_t = w_t.astype(mxu_dtype)

    # gamma/beta merged into one tiny (Cout, 2) parameter array (one DMA).
    params = jnp.stack([gamma, beta], axis=1).astype(jnp.float32)

    # Validity mask over the p_acc accumulator lanes (host-side constant).
    p_idx = np.arange(p_acc)
    n_i, rem = p_idx // L, p_idx % L
    r, s = rem // Wp, rem % Wp
    valid = ((n_i < N) & (r >= padding) & (r < padding + Ho)
             & (s >= padding) & (s < padding + Wo))
    mask = jnp.asarray(valid.reshape(1, p_acc).astype(np.float32))
    m_valid = float(N * Ho * Wo)

    itemsize = jnp.dtype(mxu_dtype).itemsize
    cost = pl.CostEstimate(
        flops=2 * Cout * Cin * KH * KW * p_acc + 8 * Cout * p_acc,
        transcendentals=Cout,
        bytes_accessed=(Cin * lin + Cout * KH * KW * Cin) * itemsize
        + 4 * (p_acc + 2 * Cout + Cout * p_acc),
    )

    vmem = pl.BlockSpec(memory_space=pltpu.MemorySpace.VMEM)
    out = pl.pallas_call(
        functools.partial(conv_bn_kernel, cin=Cin, tap_offsets=tap_offsets,
                          base=base, p_acc=p_acc, m_valid=m_valid, eps=eps),
        out_shape=jax.ShapeDtypeStruct((Cout, p_acc), jnp.float32),
        in_specs=[vmem, vmem, vmem, vmem],
        out_specs=vmem,
        compiler_params=pltpu.CompilerParams(
            allow_input_fusion=[True, True, True, True]),
        cost_estimate=cost,
    )(xf, w_t, mask, params)

    # TODO(synk): at realistic N/H/W, tile p_acc over a ("parallel",) grid with
    # partial BN stats + a finalize pass (uses v7x's 2nd TensorCore), keep
    # 2048-8192-lane M tiles, and budget VMEM explicitly per generation
    # (64 MiB v7x vs 128 MiB v5e/v6e) via vmem_limit_bytes.

    # --- output glue: (Cout, P_ACC) lane-dense -> NCHW (drop halo/pad lanes) ---
    y = out[:, :total].reshape(Cout, N, Hp, Wp)
    y = y[:, :, padding:padding + Ho, padding:padding + Wo]
    return jnp.transpose(y, (1, 0, 2, 3))


def _reference_forward(x_nchw, w_oihw, b, gamma, beta, *, eps=1e-5, padding=1):
    """Pure-JAX reference: conv2d (NCHW, with bias) + training-mode BatchNorm2d."""
    y = lax.conv_general_dilated(
        x_nchw.astype(jnp.float32),
        w_oihw.astype(jnp.float32),
        window_strides=(1, 1),
        padding=[(padding, padding), (padding, padding)],
        dimension_numbers=("NCHW", "OIHW", "NCHW"),
    ) + b.reshape(1, -1, 1, 1)
    mean = jnp.mean(y, axis=(0, 2, 3), keepdims=True)
    var = jnp.mean((y - mean) ** 2, axis=(0, 2, 3), keepdims=True)
    return (y - mean) * lax.rsqrt(var + eps) * gamma.reshape(1, -1, 1, 1) \
        + beta.reshape(1, -1, 1, 1)


if __name__ == "__main__":
    # Small deterministic shapes consistent with Conv2d(4, 8, 3, padding=1) + BatchNorm2d(8).
    N, Cin, H, W = 2, 4, 16, 16
    Cout, KH, KW = 8, 3, 3

    key = jax.random.PRNGKey(0)
    kx, kw_, kb, kg, kbe = jax.random.split(key, 5)
    x = jax.random.normal(kx, (N, Cin, H, W), dtype=jnp.float32)
    w = 0.1 * jax.random.normal(kw_, (Cout, Cin, KH, KW), dtype=jnp.float32)  # OIHW
    b = 0.1 * jax.random.normal(kb, (Cout,), dtype=jnp.float32)
    gamma = 1.0 + 0.1 * jax.random.normal(kg, (Cout,), dtype=jnp.float32)
    beta = 0.1 * jax.random.normal(kbe, (Cout,), dtype=jnp.float32)

    # 1) f32 MXU path: tight parity with the full-f32 reference.
    out_f32 = jax.block_until_ready(
        bn_model_forward(x, w, b, gamma, beta, mxu_dtype=jnp.float32))
    ref_f32 = jax.block_until_ready(_reference_forward(x, w, b, gamma, beta))
    assert out_f32.shape == (N, Cout, H, W), out_f32.shape
    err32 = float(jnp.max(jnp.abs(out_f32 - ref_f32)))
    assert jnp.allclose(out_f32, ref_f32, atol=3e-4, rtol=3e-4), err32

    # 2) bf16-MXU path (default; the v6e/v7x lever).  Compared against the same
    #    reference evaluated on bf16-rounded conv inputs so the check isolates
    #    the kernel from the (expected, documented) dtype rounding.
    out_bf16 = jax.block_until_ready(bn_model_forward(x, w, b, gamma, beta))
    ref_bf16 = jax.block_until_ready(_reference_forward(
        x.astype(jnp.bfloat16).astype(jnp.float32),
        w.astype(jnp.bfloat16).astype(jnp.float32), b, gamma, beta))
    assert out_bf16.shape == (N, Cout, H, W), out_bf16.shape
    errbf = float(jnp.max(jnp.abs(out_bf16 - ref_bf16)))
    assert jnp.allclose(out_bf16, ref_bf16, atol=2e-3, rtol=2e-3), errbf

    print("KERNEL_OK")
</pallas_src>

<mosaic_0001>
module attributes {stable_mosaic.version = 11 : i64} {
  func.func @conv_bn_kernel(%arg0: memref<4x1024xf32, #tpu.memory_space<vmem>>, %arg1: memref<8x36xf32, #tpu.memory_space<vmem>>, %arg2: memref<1x768xf32, #tpu.memory_space<vmem>>, %arg3: memref<8x2xf32, #tpu.memory_space<vmem>>, %arg4: memref<8x768xf32, #tpu.memory_space<vmem>>) attributes {dimension_semantics = [], scalar_prefetch = 0 : i64, scratch_operands = 0 : i64, tpu.core_type = #tpu.core_type<tc>} {
    %c0 = arith.constant 0 : index
    %c0_0 = arith.constant 0 : index
    %0 = vector.load %arg1[%c0, %c0_0] : memref<8x36xf32, #tpu.memory_space<vmem>>, vector<8x36xf32>
    %c0_1 = arith.constant 0 : index
    %c109 = arith.constant 109 : index
    %1 = vector.load %arg0[%c0_1, %c109] : memref<4x1024xf32, #tpu.memory_space<vmem>>, vector<4x768xf32>
    %2 = vector.extract_strided_slice %0 {offsets = [0, 0], sizes = [8, 4], strides = [1, 1]} : vector<8x36xf32> to vector<8x4xf32>
    %cst = arith.constant dense<0.000000e+00> : vector<8x768xf32>
    %3 = tpu.matmul %2, %1, %cst {dimension_numbers = #tpu.dot_dimension_numbers<[1], [0], [0], [1], [0, 0, 1, 1], [], []>} : vector<8x4xf32>, vector<4x768xf32>, vector<8x768xf32> -> vector<8x768xf32>
    %c0_2 = arith.constant 0 : index
    %c110 = arith.constant 110 : index
    %4 = vector.load %arg0[%c0_2, %c110] : memref<4x1024xf32, #tpu.memory_space<vmem>>, vector<4x768xf32>
    %5 = vector.extract_strided_slice %0 {offsets = [0, 4], sizes = [8, 4], strides = [1, 1]} : vector<8x36xf32> to vector<8x4xf32>
    %cst_3 = arith.constant dense<0.000000e+00> : vector<8x768xf32>
    %6 = tpu.matmul %5, %4, %cst_3 {dimension_numbers = #tpu.dot_dimension_numbers<[1], [0], [0], [1], [0, 0, 1, 1], [], []>} : vector<8x4xf32>, vector<4x768xf32>, vector<8x768xf32> -> vector<8x768xf32>
    %7 = arith.addf %3, %6 : vector<8x768xf32>
    %c0_4 = arith.constant 0 : index
    %c111 = arith.constant 111 : index
    %8 = vector.load %arg0[%c0_4, %c111] : memref<4x1024xf32, #tpu.memory_space<vmem>>, vector<4x768xf32>
    %9 = vector.extract_strided_slice %0 {offsets = [0, 8], sizes = [8, 4], strides = [1, 1]} : vector<8x36xf32> to vector<8x4xf32>
    %cst_5 = arith.constant dense<0.000000e+00> : vector<8x768xf32>
    %10 = tpu.matmul %9, %8, %cst_5 {dimension_numbers = #tpu.dot_dimension_numbers<[1], [0], [0], [1], [0, 0, 1, 1], [], []>} : vector<8x4xf32>, vector<4x768xf32>, vector<8x768xf32> -> vector<8x768xf32>
    %11 = arith.addf %7, %10 : vector<8x768xf32>
    %c0_6 = arith.constant 0 : index
    %c127 = arith.constant 127 : index
    %12 = vector.load %arg0[%c0_6, %c127] : memref<4x1024xf32, #tpu.memory_space<vmem>>, vector<4x768xf32>
    %13 = vector.extract_strided_slice %0 {offsets = [0, 12], sizes = [8, 4], strides = [1, 1]} : vector<8x36xf32> to vector<8x4xf32>
    %cst_7 = arith.constant dense<0.000000e+00> : vector<8x768xf32>
    %14 = tpu.matmul %13, %12, %cst_7 {dimension_numbers = #tpu.dot_dimension_numbers<[1], [0], [0], [1], [0, 0, 1, 1], [], []>} : vector<8x4xf32>, vector<4x768xf32>, vector<8x768xf32> -> vector<8x768xf32>
    %15 = arith.addf %11, %14 : vector<8x768xf32>
    %c0_8 = arith.constant 0 : index
    %c128 = arith.constant 128 : index
    %16 = vector.load %arg0[%c0_8, %c128] : memref<4x1024xf32, #tpu.memory_space<vmem>>, vector<4x768xf32>
    %17 = vector.extract_strided_slice %0 {offsets = [0, 16], sizes = [8, 4], strides = [1, 1]} : vector<8x36xf32> to vector<8x4xf32>
    %cst_9 = arith.constant dense<0.000000e+00> : vector<8x768xf32>
    %18 = tpu.matmul %17, %16, %cst_9 {dimension_numbers = #tpu.dot_dimension_numbers<[1], [0], [0], [1], [0, 0, 1, 1], [], []>} : vector<8x4xf32>, vector<4x768xf32>, vector<8x768xf32> -> vector<8x768xf32>
    %19 = arith.addf %15, %18 : vector<8x768xf32>
    %c0_10 = arith.constant 0 : index
    %c129 = arith.constant 129 : index
    %20 = vector.load %arg0[%c0_10, %c129] : memref<4x1024xf32, #tpu.memory_space<vmem>>, vector<4x768xf32>
    %21 = vector.extract_strided_slice %0 {offsets = [0, 20], sizes = [8, 4], strides = [1, 1]} : vector<8x36xf32> to vector<8x4xf32>
    %cst_11 = arith.constant dense<0.000000e+00> : vector<8x768xf32>
    %22 = tpu.matmul %21, %20, %cst_11 {dimension_numbers = #tpu.dot_dimension_numbers<[1], [0], [0], [1], [0, 0, 1, 1], [], []>} : vector<8x4xf32>, vector<4x768xf32>, vector<8x768xf32> -> vector<8x768xf32>
    %23 = arith.addf %19, %22 : vector<8x768xf32>
    %c0_12 = arith.constant 0 : index
    %c145 = arith.constant 145 : index
    %24 = vector.load %arg0[%c0_12, %c145] : memref<4x1024xf32, #tpu.memory_space<vmem>>, vector<4x768xf32>
    %25 = vector.extract_strided_slice %0 {offsets = [0, 24], sizes = [8, 4], strides = [1, 1]} : vector<8x36xf32> to vector<8x4xf32>
    %cst_13 = arith.constant dense<0.000000e+00> : vector<8x768xf32>
    %26 = tpu.matmul %25, %24, %cst_13 {dimension_numbers = #tpu.dot_dimension_numbers<[1], [0], [0], [1], [0, 0, 1, 1], [], []>} : vector<8x4xf32>, vector<4x768xf32>, vector<8x768xf32> -> vector<8x768xf32>
    %27 = arith.addf %23, %26 : vector<8x768xf32>
    %c0_14 = arith.constant 0 : index
    %c146 = arith.constant 146 : index
    %28 = vector.load %arg0[%c0_14, %c146] : memref<4x1024xf32, #tpu.memory_space<vmem>>, vector<4x768xf32>
    %29 = vector.extract_strided_slice %0 {offsets = [0, 28], sizes = [8, 4], strides = [1, 1]} : vector<8x36xf32> to vector<8x4xf32>
    %cst_15 = arith.constant dense<0.000000e+00> : vector<8x768xf32>
    %30 = tpu.matmul %29, %28, %cst_15 {dimension_numbers = #tpu.dot_dimension_numbers<[1], [0], [0], [1], [0, 0, 1, 1], [], []>} : vector<8x4xf32>, vector<4x768xf32>, vector<8x768xf32> -> vector<8x768xf32>
    %31 = arith.addf %27, %30 : vector<8x768xf32>
    %c0_16 = arith.constant 0 : index
    %c147 = arith.constant 147 : index
    %32 = vector.load %arg0[%c0_16, %c147] : memref<4x1024xf32, #tpu.memory_space<vmem>>, vector<4x768xf32>
    %33 = vector.extract_strided_slice %0 {offsets = [0, 32], sizes = [8, 4], strides = [1, 1]} : vector<8x36xf32> to vector<8x4xf32>
    %cst_17 = arith.constant dense<0.000000e+00> : vector<8x768xf32>
    %34 = tpu.matmul %33, %32, %cst_17 {dimension_numbers = #tpu.dot_dimension_numbers<[1], [0], [0], [1], [0, 0, 1, 1], [], []>} : vector<8x4xf32>, vector<4x768xf32>, vector<8x768xf32> -> vector<8x768xf32>
    %35 = arith.addf %31, %34 : vector<8x768xf32>
    %c0_18 = arith.constant 0 : index
    %c0_19 = arith.constant 0 : index
    %36 = vector.load %arg2[%c0_18, %c0_19] : memref<1x768xf32, #tpu.memory_space<vmem>>, vector<1x768xf32>
    %37 = vector.broadcast %36 : vector<1x768xf32> to vector<8x768xf32>
    %38 = arith.mulf %35, %37 : vector<8x768xf32>
    %cst_20 = arith.constant dense<0.000000e+00> : vector<8xf32>
    %39 = vector.multi_reduction <add>, %38, %cst_20 [1] : vector<8x768xf32> to vector<8xf32>
    %40 = vector.shape_cast %39 : vector<8xf32> to vector<8x1xf32>
    %41 = arith.mulf %38, %35 : vector<8x768xf32>
    %cst_21 = arith.constant dense<0.000000e+00> : vector<8xf32>
    %42 = vector.multi_reduction <add>, %41, %cst_21 [1] : vector<8x768xf32> to vector<8xf32>
    %43 = vector.shape_cast %42 : vector<8xf32> to vector<8x1xf32>
    %cst_22 = arith.constant 0.001953125 : f32
    %44 = vector.broadcast %cst_22 : f32 to vector<8x1xf32>
    %45 = arith.mulf %40, %44 : vector<8x1xf32>
    %cst_23 = arith.constant 0.001953125 : f32
    %46 = vector.broadcast %cst_23 : f32 to vector<8x1xf32>
    %47 = arith.mulf %43, %46 : vector<8x1xf32>
    %48 = arith.mulf %45, %45 : vector<8x1xf32>
    %49 = arith.subf %47, %48 : vector<8x1xf32>
    %cst_24 = arith.constant 9.99999974E-6 : f32
    %50 = vector.broadcast %cst_24 : f32 to vector<8x1xf32>
    %51 = arith.addf %49, %50 : vector<8x1xf32>
    %52 = math.rsqrt %51 : vector<8x1xf32>
    %c0_25 = arith.constant 0 : index
    %c0_26 = arith.constant 0 : index
    %53 = vector.load %arg3[%c0_25, %c0_26] : memref<8x2xf32, #tpu.memory_space<vmem>>, vector<8x1xf32>
    %c0_27 = arith.constant 0 : index
    %c1 = arith.constant 1 : index
    %54 = vector.load %arg3[%c0_27, %c1] : memref<8x2xf32, #tpu.memory_space<vmem>>, vector<8x1xf32>
    %55 = arith.mulf %52, %53 : vector<8x1xf32>
    %56 = arith.mulf %45, %55 : vector<8x1xf32>
    %57 = arith.subf %54, %56 : vector<8x1xf32>
    %58 = vector.broadcast %55 : vector<8x1xf32> to vector<8x768xf32>
    %59 = arith.mulf %35, %58 : vector<8x768xf32>
    %60 = vector.broadcast %57 : vector<8x1xf32> to vector<8x768xf32>
    %61 = arith.addf %59, %60 : vector<8x768xf32>
    %c0_28 = arith.constant 0 : index
    %c0_29 = arith.constant 0 : index
    %62 = vector.load %arg4[%c0_28, %c0_29] : memref<8x768xf32, #tpu.memory_space<vmem>>, vector<8x768xf32>
    tpu.vector_store %arg4[%c0_28, %c0_29], %61 {strides = array<i32>} : memref<8x768xf32, #tpu.memory_space<vmem>>, vector<8x768xf32>,
    return
  }
}

</mosaic_0001>

<llo_original>
// kernel: tpu_custom_call.1
$region0: #{tpu_custom_call.1}
  #allocation0 [shape = 'u32[]', space=smem, size = 0x4, offset = 0x4, fixed_abs, tag = 'smem constant byte address 0x4 - core index']
  #allocation1 [shape = 'u32[144,128]{1,0:T(1,128)}', space=vmem, size = 0x12000, scoped, tag = 'internal scratch']
  %s0 = inlined_call_operand.hbm [shape: f32[4,1024], index: 0, kind: input, shape index: {}]
  %s1 = inlined_call_operand.vmem [shape: f32[8,36], index: 1, kind: input, shape index: {}]
  %s2 = inlined_call_operand.vmem [shape: f32[1,768], index: 2, kind: input, shape index: {}]
  %s3 = inlined_call_operand.vmem [shape: f32[8,2], index: 3, kind: input, shape index: {}]
  %s4 = inlined_call_operand.hbm [shape: f32[8,768], index: 4, kind: output, shape index: {}]
  %s5 = sld [smem:[#allocation0]]
  $region30: #{tpu_custom_call.1} parent=0
    _
  %s7 = ssub.s32 1, %s5
  %s8 = scalar_select 0, %s7, %s5
  $region1: #{tpu_custom_call.1} parent=0
    #allocation2 [shape = 'u8[16384]{0}', space=vmem, size = 0x4000, scoped, tag = 'input window, operand 0, single buffered']
    #allocation3 [shape = 's32[1]{0}', space=sflag, size = 0x4, scoped, tag = 'scoped memory for tpu_custom_call.1']
    #allocation4 [shape = 's32[1]{0}', space=sflag, size = 0x4, scoped, tag = 'scoped memory for tpu_custom_call.1']
    #allocation5 [shape = 'u8[24576]{0}', space=vmem, size = 0x6000, scoped, tag = 'output window, operand 0, single buffered']
    %9 = vsyncpa [#allocation3], 0
    %10 = vsyncpa [#allocation4], 0
    // Predicated region
    $region2: #{tpu_custom_call.1} parent=1 // pred_check
      _
    $region3: #{tpu_custom_call.1} parent=1 // pred_check_branch
      %12 = sbr.rel (0) target = $region5
    $region4: #{tpu_custom_call.1} parent=1 // pred_region
      %s14 = ssub.s32 512, 512
      %15 = vsyncadd [#allocation3], %s14
      %s17 = sshll.u32 [#allocation2], 4
      %s18 = int_to_ptr.vmem [resolvable:$true] %s17
      %20 = dma.hbm_to_vmem [thread:$0]  %s0, 512, %s18, [#allocation3]
    $region5: #{tpu_custom_call.1} parent=1 // pred_fallthru
      _
    // Predicated region
    $region6: #{tpu_custom_call.1} parent=1 // pred_check
      _
    $region7: #{tpu_custom_call.1} parent=1 // pred_check_branch
      %22 = sbr.rel (0) target = $region9
    $region8: #{tpu_custom_call.1} parent=1 // pred_region
      _
    $region9: #{tpu_custom_call.1} parent=1 // pred_fallthru
      _
    // Predicated region
    $region10: #{tpu_custom_call.1} parent=1 // pred_check
      _
    $region11: #{tpu_custom_call.1} parent=1 // pred_check_branch
      %24 = sbr.rel (0) target = $region13
    $region12: #{tpu_custom_call.1} parent=1 // pred_region
      _
    $region13: #{tpu_custom_call.1} parent=1 // pred_fallthru
      _
    // Predicated region
    $region14: #{tpu_custom_call.1} parent=1 // pred_check
      _
    $region15: #{tpu_custom_call.1} parent=1 // pred_check_branch
      %26 = sbr.rel (0) target = $region17
    $region16: #{tpu_custom_call.1} parent=1 // pred_region
      _
    $region17: #{tpu_custom_call.1} parent=1 // pred_fallthru
      _
    // Predicated region
    $region18: #{tpu_custom_call.1} parent=1 // pred_check
      _
    $region19: #{tpu_custom_call.1} parent=1 // pred_check_branch
      %28 = sbr.rel (0) target = $region21
    $region20: #{tpu_custom_call.1} parent=1 // pred_region
      %29 = dma.done [#allocation3], 512
    $region21: #{tpu_custom_call.1} parent=1 // pred_fallthru
      _
    %v30 = vld [vmem:[%s1] sm:$0xff]
    %v31 = vld [vmem:[#allocation2] sm:$0xff]
    %v32 = vld [vmem:[#allocation2 + $0x8] sm:$0xff]
    %v33 = vld [vmem:[#allocation2 + $0x10] sm:$0xff]
    %v34 = vld [vmem:[#allocation2 + $0x18] sm:$0xf]
    %36 = vrot.lane.b32.xlu0 %v30, 124
    %v37 = vpop.permute.xlu0 %36
    %v42 = vcombine.high %v31, %v31
    %v43 = vcombine.high %v32, %v32
    %v44 = vcombine.high %v33, %v33
    %45 = vrot.lane.b32.xlu0 %v31, 18
    %v46 = vpop.permute.xlu0 %45
    %47 = vrot.lane.b32.xlu0 %v42, 18
    %v48 = vpop.permute.xlu0 %47
    %49 = vrot.lane.b32.xlu0 %v32, 18
    %v50 = vpop.permute.xlu0 %49
    %51 = vrot.lane.b32.xlu0 %v43, 18
    %v52 = vpop.permute.xlu0 %51
    %53 = vrot.lane.b32.xlu0 %v33, 18
    %v54 = vpop.permute.xlu0 %53
    %55 = vrot.lane.b32.xlu0 %v44, 18
    %v56 = vpop.permute.xlu0 %55
    %57 = vrot.lane.b32.xlu0 %v34, 18
    %v58 = vpop.permute.xlu0 %57
    %vm59 = vcmask 146432
    %v60 = vsel %vm59, %v46, %v48
    %v61 = vsel %vm59, %v48, %v50
    %v62 = vsel %vm59, %v50, %v52
    %v63 = vsel %vm59, %v52, %v54
    %v64 = vsel %vm59, %v54, %v56
    %v65 = vsel %vm59, %v56, %v58
    %vm66 = vcmask 31744
    %v67 = vsel %vm66, %v37, 0
    %vm69 = vcmask 1043456
    %v70 = vsel %vm69, %v60, 0
    %v72 = vsel %vm69, %v61, 0
    %v74 = vsel %vm69, %v62, 0
    %v76 = vsel %vm69, %v63, 0
    %v78 = vsel %vm69, %v64, 0
    %v80 = vsel %vm69, %v65, 0
    %82 = vmatprep.subr.mxu0 %v72
    %83 = vmatpush1.msra.mxu0 %v70
    %84 = vmatprep.subr.mxu0 0.0
    %85 = vmatpush1.msra.mxu0 0.0
    %86 = vmatprep.subr.mxu0 0.0
    %87 = vmatpush1.msra.mxu0 0.0
    %88 = vmatprep.subr.mxu0 0.0
    %89 = vmatpush1.msra.mxu0 0.0
    %90 = vmatprep.subr.mxu0 0.0
    %91 = vmatpush1.msra.mxu0 0.0
    %92 = vmatprep.subr.mxu0 0.0
    %93 = vmatpush1.msra.mxu0 0.0
    %94 = vmatprep.subr.mxu0 0.0
    %95 = vmatpush1.msra.mxu0 0.0
    %96 = vmatprep.subr.mxu0 0.0
    %97 = vmatpush1.msra.mxu0 0.0
    %98 = vmatprep.subr.mxu0 0.0
    %99 = vmatpush1.msra.mxu0 0.0
    %100 = vmatprep.subr.mxu0 0.0
    %101 = vmatpush1.msra.mxu0 0.0
    %102 = vmatprep.subr.mxu0 0.0
    %103 = vmatpush1.msra.mxu0 0.0
    %104 = vmatprep.subr.mxu0 0.0
    %105 = vmatpush1.msra.mxu0 0.0
    %106 = vmatprep.subr.mxu0 0.0
    %107 = vmatpush1.msra.mxu0 0.0
    %108 = vmatprep.subr.mxu0 0.0
    %109 = vmatpush1.msra.mxu0 0.0
    %110 = vmatprep.subr.mxu0 0.0
    %111 = vmatpush1.msra.mxu0 0.0
    %112 = vmatprep.subr.mxu0 0.0
    %113 = vmatpush1.msra.mxu0 0.0
    %114 = vmatprep.subr.mxu0 0.0
    %115 = vmatpush1.msra.mxu0 0.0
    %116 = vmatprep.subr.mxu0 0.0
    %117 = vmatpush1.msra.mxu0 0.0
    %118 = vmatprep.subr.mxu0 0.0
    %119 = vmatpush1.msra.mxu0 0.0
    %120 = vmatprep.subr.mxu0 0.0
    %121 = vmatpush1.msra.mxu0 0.0
    %122 = vmatprep.subr.mxu0 0.0
    %123 = vmatpush1.msra.mxu0 0.0
    %124 = vmatprep.subr.mxu0 0.0
    %125 = vmatpush1.msra.mxu0 0.0
    %126 = vmatprep.subr.mxu0 0.0
    %127 = vmatpush1.msra.mxu0 0.0
    %128 = vmatprep.subr.mxu0 0.0
    %129 = vmatpush1.msra.mxu0 0.0
    %130 = vmatprep.subr.mxu0 0.0
    %131 = vmatpush1.msra.mxu0 0.0
    %132 = vmatprep.subr.mxu0 0.0
    %133 = vmatpush1.msra.mxu0 0.0
    %134 = vmatprep.subr.mxu0 0.0
    %135 = vmatpush1.msra.mxu0 0.0
    %136 = vmatprep.subr.mxu0 0.0
    %137 = vmatpush1.msra.mxu0 0.0
    %138 = vmatprep.subr.mxu0 0.0
    %139 = vmatpush1.msra.mxu0 0.0
    %140 = vmatprep.subr.mxu0 0.0
    %141 = vmatpush1.msra.mxu0 0.0
    %142 = vmatprep.subr.mxu0 0.0
    %143 = vmatpush1.msra.mxu0 0.0
    %144 = vmatprep.subr.mxu0 0.0
    %145 = vmatpush1.msra.mxu0 0.0
    %146 = vmatprep.mubr.f32.mxu0 0.0
    %147 = vmatmul.mubr.f32.gmra.mrb[0].mxu0 %v67
    %v148 = vpop.f32.mrb[0].mxu0
    %v149 = vadd.f32 0.0, %v148
    %v150 = vpop.f32.mrb[0].mxu0
    %v151 = vadd.f32 0.0, %v150
    %152 = vdwg.mxu0
    %153 = vmatprep.subr.mxu0 %v76
    %154 = vmatpush1.msra.mxu0 %v74
    %155 = vmatprep.subr.mxu0 0.0
    %156 = vmatpush1.msra.mxu0 0.0
    %157 = vmatprep.subr.mxu0 0.0
    %158 = vmatpush1.msra.mxu0 0.0
    %159 = vmatprep.subr.mxu0 0.0
    %160 = vmatpush1.msra.mxu0 0.0
    %161 = vmatprep.subr.mxu0 0.0
    %162 = vmatpush1.msra.mxu0 0.0
    %163 = vmatprep.subr.mxu0 0.0
    %164 = vmatpush1.msra.mxu0 0.0
    %165 = vmatprep.subr.mxu0 0.0
    %166 = vmatpush1.msra.mxu0 0.0
    %167 = vmatprep.subr.mxu0 0.0
    %168 = vmatpush1.msra.mxu0 0.0
    %169 = vmatprep.subr.mxu0 0.0
    %170 = vmatpush1.msra.mxu0 0.0
    %171 = vmatprep.subr.mxu0 0.0
    %172 = vmatpush1.msra.mxu0 0.0
    %173 = vmatprep.subr.mxu0 0.0
    %174 = vmatpush1.msra.mxu0 0.0
    %175 = vmatprep.subr.mxu0 0.0
    %176 = vmatpush1.msra.mxu0 0.0
    %177 = vmatprep.subr.mxu0 0.0
    %178 = vmatpush1.msra.mxu0 0.0
    %179 = vmatprep.subr.mxu0 0.0
    %180 = vmatpush1.msra.mxu0 0.0
    %181 = vmatprep.subr.mxu0 0.0
    %182 = vmatpush1.msra.mxu0 0.0
    %183 = vmatprep.subr.mxu0 0.0
    %184 = vmatpush1.msra.mxu0 0.0
    %185 = vmatprep.subr.mxu0 0.0
    %186 = vmatpush1.msra.mxu0 0.0
    %187 = vmatprep.subr.mxu0 0.0
    %188 = vmatpush1.msra.mxu0 0.0
    %189 = vmatprep.subr.mxu0 0.0
    %190 = vmatpush1.msra.mxu0 0.0
    %191 = vmatprep.subr.mxu0 0.0
    %192 = vmatpush1.msra.mxu0 0.0
    %193 = vmatprep.subr.mxu0 0.0
    %194 = vmatpush1.msra.mxu0 0.0
    %195 = vmatprep.subr.mxu0 0.0
    %196 = vmatpush1.msra.mxu0 0.0
    %197 = vmatprep.subr.mxu0 0.0
    %198 = vmatpush1.msra.mxu0 0.0
    %199 = vmatprep.subr.mxu0 0.0
    %200 = vmatpush1.msra.mxu0 0.0
    %201 = vmatprep.subr.mxu0 0.0
    %202 = vmatpush1.msra.mxu0 0.0
    %203 = vmatprep.subr.mxu0 0.0
    %204 = vmatpush1.msra.mxu0 0.0
    %205 = vmatprep.subr.mxu0 0.0
    %206 = vmatpush1.msra.mxu0 0.0
    %207 = vmatprep.subr.mxu0 0.0
    %208 = vmatpush1.msra.mxu0 0.0
    %209 = vmatprep.subr.mxu0 0.0
    %210 = vmatpush1.msra.mxu0 0.0
    %211 = vmatprep.subr.mxu0 0.0
    %212 = vmatpush1.msra.mxu0 0.0
    %213 = vmatprep.subr.mxu0 0.0
    %214 = vmatpush1.msra.mxu0 0.0
    %215 = vmatprep.subr.mxu0 0.0
    %216 = vmatpush1.msra.mxu0 0.0
    %217 = vmatprep.mubr.f32.mxu0 0.0
    %218 = vmatmul.mubr.f32.gmra.mrb[0].mxu0 %v67
    %v219 = vpop.f32.mrb[0].mxu0
    %v220 = vadd.f32 0.0, %v219
    %v221 = vpop.f32.mrb[0].mxu0
    %v222 = vadd.f32 0.0, %v221
    %223 = vdwg.mxu0
    %224 = vmatprep.subr.mxu0 %v80
    %225 = vmatpush1.msra.mxu0 %v78
    %226 = vmatprep.subr.mxu0 0.0
    %227 = vmatpush1.msra.mxu0 0.0
    %228 = vmatprep.subr.mxu0 0.0
    %229 = vmatpush1.msra.mxu0 0.0
    %230 = vmatprep.subr.mxu0 0.0
    %231 = vmatpush1.msra.mxu0 0.0
    %232 = vmatprep.subr.mxu0 0.0
    %233 = vmatpush1.msra.mxu0 0.0
    %234 = vmatprep.subr.mxu0 0.0
    %235 = vmatpush1.msra.mxu0 0.0
    %236 = vmatprep.subr.mxu0 0.0
    %237 = vmatpush1.msra.mxu0 0.0
    %238 = vmatprep.subr.mxu0 0.0
    %239 = vmatpush1.msra.mxu0 0.0
    %240 = vmatprep.subr.mxu0 0.0
    %241 = vmatpush1.msra.mxu0 0.0
    %242 = vmatprep.subr.mxu0 0.0
    %243 = vmatpush1.msra.mxu0 0.0
    %244 = vmatprep.subr.mxu0 0.0
    %245 = vmatpush1.msra.mxu0 0.0
    %246 = vmatprep.subr.mxu0 0.0
    %247 = vmatpush1.msra.mxu0 0.0
    %248 = vmatprep.subr.mxu0 0.0
    %249 = vmatpush1.msra.mxu0 0.0
    %250 = vmatprep.subr.mxu0 0.0
    %251 = vmatpush1.msra.mxu0 0.0
    %252 = vmatprep.subr.mxu0 0.0
    %253 = vmatpush1.msra.mxu0 0.0
    %254 = vmatprep.subr.mxu0 0.0
    %255 = vmatpush1.msra.mxu0 0.0
    %256 = vmatprep.subr.mxu0 0.0
    %257 = vmatpush1.msra.mxu0 0.0
    %258 = vmatprep.subr.mxu0 0.0
    %259 = vmatpush1.msra.mxu0 0.0
    %260 = vmatprep.subr.mxu0 0.0
    %261 = vmatpush1.msra.mxu0 0.0
    %262 = vmatprep.subr.mxu0 0.0
    %263 = vmatpush1.msra.mxu0 0.0
    %264 = vmatprep.subr.mxu0 0.0
    %265 = vmatpush1.msra.mxu0 0.0
    %266 = vmatprep.subr.mxu0 0.0
    %267 = vmatpush1.msra.mxu0 0.0
    %268 = vmatprep.subr.mxu0 0.0
    %269 = vmatpush1.msra.mxu0 0.0
    %270 = vmatprep.subr.mxu0 0.0
    %271 = vmatpush1.msra.mxu0 0.0
    %272 = vmatprep.subr.mxu0 0.0
    %273 = vmatpush1.msra.mxu0 0.0
    %274 = vmatprep.subr.mxu0 0.0
    %275 = vmatpush1.msra.mxu0 0.0
    %276 = vmatprep.subr.mxu0 0.0
    %277 = vmatpush1.msra.mxu0 0.0
    %278 = vmatprep.subr.mxu0 0.0
    %279 = vmatpush1.msra.mxu0 0.0
    %280 = vmatprep.subr.mxu0 0.0
    %281 = vmatpush1.msra.mxu0 0.0
    %282 = vmatprep.subr.mxu0 0.0
    %283 = vmatpush1.msra.mxu0 0.0
    %284 = vmatprep.subr.mxu0 0.0
    %285 = vmatpush1.msra.mxu0 0.0
    %286 = vmatprep.subr.mxu0 0.0
    %287 = vmatpush1.msra.mxu0 0.0
    %288 = vmatprep.mubr.f32.mxu0 0.0
    %289 = vmatmul.mubr.f32.gmra.mrb[0].mxu0 %v67
    %v290 = vpop.f32.mrb[0].mxu0
    %v291 = vadd.f32 0.0, %v290
    %v292 = vpop.f32.mrb[0].mxu0
    %v293 = vadd.f32 0.0, %v292
    %294 = vdwg.mxu0
    %295 = vrot.lane.b32.xlu0 %v31, 19
    %v296 = vpop.permute.xlu0 %295
    %297 = vrot.lane.b32.xlu0 %v42, 19
    %v298 = vpop.permute.xlu0 %297
    %299 = vrot.lane.b32.xlu0 %v32, 19
    %v300 = vpop.permute.xlu0 %299
    %301 = vrot.lane.b32.xlu0 %v43, 19
    %v302 = vpop.permute.xlu0 %301
    %303 = vrot.lane.b32.xlu0 %v33, 19
    %v304 = vpop.permute.xlu0 %303
    %305 = vrot.lane.b32.xlu0 %v44, 19
    %v306 = vpop.permute.xlu0 %305
    %307 = vrot.lane.b32.xlu0 %v34, 19
    %v308 = vpop.permute.xlu0 %307
    %vm309 = vcmask 154624
    %v310 = vsel %vm309, %v296, %v298
    %v311 = vsel %vm309, %v298, %v300
    %v312 = vsel %vm309, %v300, %v302
    %v313 = vsel %vm309, %v302, %v304
    %v314 = vsel %vm309, %v304, %v306
    %v315 = vsel %vm309, %v306, %v308
    %v316 = vsel %vm66, %v30, 0
    %v318 = vsel %vm69, %v310, 0
    %v320 = vsel %vm69, %v311, 0
    %v322 = vsel %vm69, %v312, 0
    %v324 = vsel %vm69, %v313, 0
    %v326 = vsel %vm69, %v314, 0
    %v328 = vsel %vm69, %v315, 0
    %330 = vmatprep.subr.mxu0 %v320
    %331 = vmatpush1.msra.mxu0 %v318
    %332 = vmatprep.subr.mxu0 0.0
    %333 = vmatpush1.msra.mxu0 0.0
    %334 = vmatprep.subr.mxu0 0.0
    %335 = vmatpush1.msra.mxu0 0.0
    %336 = vmatprep.subr.mxu0 0.0
    %337 = vmatpush1.msra.mxu0 0.0
    %338 = vmatprep.subr.mxu0 0.0
    %339 = vmatpush1.msra.mxu0 0.0
    %340 = vmatprep.subr.mxu0 0.0
    %341 = vmatpush1.msra.mxu0 0.0
    %342 = vmatprep.subr.mxu0 0.0
    %343 = vmatpush1.msra.mxu0 0.0
    %344 = vmatprep.subr.mxu0 0.0
    %345 = vmatpush1.msra.mxu0 0.0
    %346 = vmatprep.subr.mxu0 0.0
    %347 = vmatpush1.msra.mxu0 0.0
    %348 = vmatprep.subr.mxu0 0.0
    %349 = vmatpush1.msra.mxu0 0.0
    %350 = vmatprep.subr.mxu0 0.0
    %351 = vmatpush1.msra.mxu0 0.0
    %352 = vmatprep.subr.mxu0 0.0
    %353 = vmatpush1.msra.mxu0 0.0
    %354 = vmatprep.subr.mxu0 0.0
    %355 = vmatpush1.msra.mxu0 0.0
    %356 = vmatprep.subr.mxu0 0.0
    %357 = vmatpush1.msra.mxu0 0.0
    %358 = vmatprep.subr.mxu0 0.0
    %359 = vmatpush1.msra.mxu0 0.0
    %360 = vmatprep.subr.mxu0 0.0
    %361 = vmatpush1.msra.mxu0 0.0
    %362 = vmatprep.subr.mxu0 0.0
    %363 = vmatpush1.msra.mxu0 0.0
    %364 = vmatprep.subr.mxu0 0.0
    %365 = vmatpush1.msra.mxu0 0.0
    %366 = vmatprep.subr.mxu0 0.0
    %367 = vmatpush1.msra.mxu0 0.0
    %368 = vmatprep.subr.mxu0 0.0
    %369 = vmatpush1.msra.mxu0 0.0
    %370 = vmatprep.subr.mxu0 0.0
    %371 = vmatpush1.msra.mxu0 0.0
    %372 = vmatprep.subr.mxu0 0.0
    %373 = vmatpush1.msra.mxu0 0.0
    %374 = vmatprep.subr.mxu0 0.0
    %375 = vmatpush1.msra.mxu0 0.0
    %376 = vmatprep.subr.mxu0 0.0
    %377 = vmatpush1.msra.mxu0 0.0
    %378 = vmatprep.subr.mxu0 0.0
    %379 = vmatpush1.msra.mxu0 0.0
    %380 = vmatprep.subr.mxu0 0.0
    %381 = vmatpush1.msra.mxu0 0.0
    %382 = vmatprep.subr.mxu0 0.0
    %383 = vmatpush1.msra.mxu0 0.0
    %384 = vmatprep.subr.mxu0 0.0
    %385 = vmatpush1.msra.mxu0 0.0
    %386 = vmatprep.subr.mxu0 0.0
    %387 = vmatpush1.msra.mxu0 0.0
    %388 = vmatprep.subr.mxu0 0.0
    %389 = vmatpush1.msra.mxu0 0.0
    %390 = vmatprep.subr.mxu0 0.0
    %391 = vmatpush1.msra.mxu0 0.0
    %392 = vmatprep.subr.mxu0 0.0
    %393 = vmatpush1.msra.mxu0 0.0
    %394 = vmatprep.mubr.f32.mxu0 0.0
    %395 = vmatmul.mubr.f32.gmra.mrb[0].mxu0 %v316
    %v396 = vpop.f32.mrb[0].mxu0
    %v397 = vadd.f32 %v149, %v396
    %v398 = vpop.f32.mrb[0].mxu0
    %v399 = vadd.f32 %v151, %v398
    %400 = vdwg.mxu0
    %401 = vmatprep.subr.mxu0 %v324
    %402 = vmatpush1.msra.mxu0 %v322
    %403 = vmatprep.subr.mxu0 0.0
    %404 = vmatpush1.msra.mxu0 0.0
    %405 = vmatprep.subr.mxu0 0.0
    %406 = vmatpush1.msra.mxu0 0.0
    %407 = vmatprep.subr.mxu0 0.0
    %408 = vmatpush1.msra.mxu0 0.0
    %409 = vmatprep.subr.mxu0 0.0
    %410 = vmatpush1.msra.mxu0 0.0
    %411 = vmatprep.subr.mxu0 0.0
    %412 = vmatpush1.msra.mxu0 0.0
    %413 = vmatprep.subr.mxu0 0.0
    %414 = vmatpush1.msra.mxu0 0.0
    %415 = vmatprep.subr.mxu0 0.0
    %416 = vmatpush1.msra.mxu0 0.0
    %417 = vmatprep.subr.mxu0 0.0
    %418 = vmatpush1.msra.mxu0 0.0
    %419 = vmatprep.subr.mxu0 0.0
    %420 = vmatpush1.msra.mxu0 0.0
    %421 = vmatprep.subr.mxu0 0.0
    %422 = vmatpush1.msra.mxu0 0.0
    %423 = vmatprep.subr.mxu0 0.0
    %424 = vmatpush1.msra.mxu0 0.0
    %425 = vmatprep.subr.mxu0 0.0
    %426 = vmatpush1.msra.mxu0 0.0
    %427 = vmatprep.subr.mxu0 0.0
    %428 = vmatpush1.msra.mxu0 0.0
    %429 = vmatprep.subr.mxu0 0.0
    %430 = vmatpush1.msra.mxu0 0.0
    %431 = vmatprep.subr.mxu0 0.0
    %432 = vmatpush1.msra.mxu0 0.0
    %433 = vmatprep.subr.mxu0 0.0
    %434 = vmatpush1.msra.mxu0 0.0
    %435 = vmatprep.subr.mxu0 0.0
    %436 = vmatpush1.msra.mxu0 0.0
    %437 = vmatprep.subr.mxu0 0.0
    %438 = vmatpush1.msra.mxu0 0.0
    %439 = vmatprep.subr.mxu0 0.0
    %440 = vmatpush1.msra.mxu0 0.0
    %441 = vmatprep.subr.mxu0 0.0
    %442 = vmatpush1.msra.mxu0 0.0
    %443 = vmatprep.subr.mxu0 0.0
    %444 = vmatpush1.msra.mxu0 0.0
    %445 = vmatprep.subr.mxu0 0.0
    %446 = vmatpush1.msra.mxu0 0.0
    %447 = vmatprep.subr.mxu0 0.0
    %448 = vmatpush1.msra.mxu0 0.0
    %449 = vmatprep.subr.mxu0 0.0
    %450 = vmatpush1.msra.mxu0 0.0
    %451 = vmatprep.subr.mxu0 0.0
    %452 = vmatpush1.msra.mxu0 0.0
    %453 = vmatprep.subr.mxu0 0.0
    %454 = vmatpush1.msra.mxu0 0.0
    %455 = vmatprep.subr.mxu0 0.0
    %456 = vmatpush1.msra.mxu0 0.0
    %457 = vmatprep.subr.mxu0 0.0
    %458 = vmatpush1.msra.mxu0 0.0
    %459 = vmatprep.subr.mxu0 0.0
    %460 = vmatpush1.msra.mxu0 0.0
    %461 = vmatprep.subr.mxu0 0.0
    %462 = vmatpush1.msra.mxu0 0.0
    %463 = vmatprep.subr.mxu0 0.0
    %464 = vmatpush1.msra.mxu0 0.0
    %465 = vmatprep.mubr.f32.mxu0 0.0
    %466 = vmatmul.mubr.f32.gmra.mrb[0].mxu0 %v316
    %v467 = vpop.f32.mrb[0].mxu0
    %v468 = vadd.f32 %v220, %v467
    %v469 = vpop.f32.mrb[0].mxu0
    %v470 = vadd.f32 %v222, %v469
    %471 = vdwg.mxu0
    %472 = vmatprep.subr.mxu0 %v328
    %473 = vmatpush1.msra.mxu0 %v326
    %474 = vmatprep.subr.mxu0 0.0
    %475 = vmatpush1.msra.mxu0 0.0
    %476 = vmatprep.subr.mxu0 0.0
    %477 = vmatpush1.msra.mxu0 0.0
    %478 = vmatprep.subr.mxu0 0.0
    %479 = vmatpush1.msra.mxu0 0.0
    %480 = vmatprep.subr.mxu0 0.0
    %481 = vmatpush1.msra.mxu0 0.0
    %482 = vmatprep.subr.mxu0 0.0
    %483 = vmatpush1.msra.mxu0 0.0
    %484 = vmatprep.subr.mxu0 0.0
    %485 = vmatpush1.msra.mxu0 0.0
    %486 = vmatprep.subr.mxu0 0.0
    %487 = vmatpush1.msra.mxu0 0.0
    %488 = vmatprep.subr.mxu0 0.0
    %489 = vmatpush1.msra.mxu0 0.0
    %490 = vmatprep.subr.mxu0 0.0
    %491 = vmatpush1.msra.mxu0 0.0
    %492 = vmatprep.subr.mxu0 0.0
    %493 = vmatpush1.msra.mxu0 0.0
    %494 = vmatprep.subr.mxu0 0.0
    %495 = vmatpush1.msra.mxu0 0.0
    %496 = vmatprep.subr.mxu0 0.0
    %497 = vmatpush1.msra.mxu0 0.0
    %498 = vmatprep.subr.mxu0 0.0
    %499 = vmatpush1.msra.mxu0 0.0
    %500 = vmatprep.subr.mxu0 0.0
    %501 = vmatpush1.msra.mxu0 0.0
    %502 = vmatprep.subr.mxu0 0.0
    %503 = vmatpush1.msra.mxu0 0.0
    %504 = vmatprep.subr.mxu0 0.0
    %505 = vmatpush1.msra.mxu0 0.0
    %506 = vmatprep.subr.mxu0 0.0
    %507 = vmatpush1.msra.mxu0 0.0
    %508 = vmatprep.subr.mxu0 0.0
    %509 = vmatpush1.msra.mxu0 0.0
    %510 = vmatprep.subr.mxu0 0.0
    %511 = vmatpush1.msra.mxu0 0.0
    %512 = vmatprep.subr.mxu0 0.0
    %513 = vmatpush1.msra.mxu0 0.0
    %514 = vmatprep.subr.mxu0 0.0
    %515 = vmatpush1.msra.mxu0 0.0
    %516 = vmatprep.subr.mxu0 0.0
    %517 = vmatpush1.msra.mxu0 0.0
    %518 = vmatprep.subr.mxu0 0.0
    %519 = vmatpush1.msra.mxu0 0.0
    %520 = vmatprep.subr.mxu0 0.0
    %521 = vmatpush1.msra.mxu0 0.0
    %522 = vmatprep.subr.mxu0 0.0
    %523 = vmatpush1.msra.mxu0 0.0
    %524 = vmatprep.subr.mxu0 0.0
    %525 = vmatpush1.msra.mxu0 0.0
    %526 = vmatprep.subr.mxu0 0.0
    %527 = vmatpush1.msra.mxu0 0.0
    %528 = vmatprep.subr.mxu0 0.0
    %529 = vmatpush1.msra.mxu0 0.0
    %530 = vmatprep.subr.mxu0 0.0
    %531 = vmatpush1.msra.mxu0 0.0
    %532 = vmatprep.subr.mxu0 0.0
    %533 = vmatpush1.msra.mxu0 0.0
    %534 = vmatprep.subr.mxu0 0.0
    %535 = vmatpush1.msra.mxu0 0.0
    %536 = vmatprep.mubr.f32.mxu0 0.0
    %537 = vmatmul.mubr.f32.gmra.mrb[0].mxu0 %v316
    %v538 = vpop.f32.mrb[0].mxu0
    %v539 = vadd.f32 %v291, %v538
    %v540 = vpop.f32.mrb[0].mxu0
    %v541 = vadd.f32 %v293, %v540
    %542 = vdwg.mxu0
    %v543 = vld [vmem:[#allocation2] sm:$0xff]
    %v544 = vld [vmem:[#allocation2 + $0x8] sm:$0xff]
    %v545 = vld [vmem:[#allocation2 + $0x10] sm:$0xff]
    %v546 = vld [vmem:[#allocation2 + $0x18] sm:$0xf]
    %547 = vrot.lane.b32.xlu0 %v30, 120
    %v548 = vpop.permute.xlu0 %547
    %v553 = vcombine.high %v543, %v543
    %v554 = vcombine.high %v544, %v544
    %v555 = vcombine.high %v545, %v545
    %556 = vrot.lane.b32.xlu0 %v543, 17
    %v557 = vpop.permute.xlu0 %556
    %558 = vrot.lane.b32.xlu0 %v553, 17
    %v559 = vpop.permute.xlu0 %558
    %560 = vrot.lane.b32.xlu0 %v544, 17
    %v561 = vpop.permute.xlu0 %560
    %562 = vrot.lane.b32.xlu0 %v554, 17
    %v563 = vpop.permute.xlu0 %562
    %564 = vrot.lane.b32.xlu0 %v545, 17
    %v565 = vpop.permute.xlu0 %564
    %566 = vrot.lane.b32.xlu0 %v555, 17
    %v567 = vpop.permute.xlu0 %566
    %568 = vrot.lane.b32.xlu0 %v546, 17
    %v569 = vpop.permute.xlu0 %568
    %vm570 = vcmask 138240
    %v571 = vsel %vm570, %v557, %v559
    %v572 = vsel %vm570, %v559, %v561
    %v573 = vsel %vm570, %v561, %v563
    %v574 = vsel %vm570, %v563, %v565
    %v575 = vsel %vm570, %v565, %v567
    %v576 = vsel %vm570, %v567, %v569
    %v577 = vsel %vm66, %v548, 0
    %v579 = vsel %vm69, %v571, 0
    %v581 = vsel %vm69, %v572, 0
    %v583 = vsel %vm69, %v573, 0
    %v585 = vsel %vm69, %v574, 0
    %v587 = vsel %vm69, %v575, 0
    %v589 = vsel %vm69, %v576, 0
    %591 = vmatprep.subr.mxu0 %v581
    %592 = vmatpush1.msra.mxu0 %v579
    %593 = vmatprep.subr.mxu0 0.0
    %594 = vmatpush1.msra.mxu0 0.0
    %595 = vmatprep.subr.mxu0 0.0
    %596 = vmatpush1.msra.mxu0 0.0
    %597 = vmatprep.subr.mxu0 0.0
    %598 = vmatpush1.msra.mxu0 0.0
    %599 = vmatprep.subr.mxu0 0.0
    %600 = vmatpush1.msra.mxu0 0.0
    %601 = vmatprep.subr.mxu0 0.0
    %602 = vmatpush1.msra.mxu0 0.0
    %603 = vmatprep.subr.mxu0 0.0
    %604 = vmatpush1.msra.mxu0 0.0
    %605 = vmatprep.subr.mxu0 0.0
    %606 = vmatpush1.msra.mxu0 0.0
    %607 = vmatprep.subr.mxu0 0.0
    %608 = vmatpush1.msra.mxu0 0.0
    %609 = vmatprep.subr.mxu0 0.0
    %610 = vmatpush1.msra.mxu0 0.0
    %611 = vmatprep.subr.mxu0 0.0
    %612 = vmatpush1.msra.mxu0 0.0
    %613 = vmatprep.subr.mxu0 0.0
    %614 = vmatpush1.msra.mxu0 0.0
    %615 = vmatprep.subr.mxu0 0.0
    %616 = vmatpush1.msra.mxu0 0.0
    %617 = vmatprep.subr.mxu0 0.0
    %618 = vmatpush1.msra.mxu0 0.0
    %619 = vmatprep.subr.mxu0 0.0
    %620 = vmatpush1.msra.mxu0 0.0
    %621 = vmatprep.subr.mxu0 0.0
    %622 = vmatpush1.msra.mxu0 0.0
    %623 = vmatprep.subr.mxu0 0.0
    %624 = vmatpush1.msra.mxu0 0.0
    %625 = vmatprep.subr.mxu0 0.0
    %626 = vmatpush1.msra.mxu0 0.0
    %627 = vmatprep.subr.mxu0 0.0
    %628 = vmatpush1.msra.mxu0 0.0
    %629 = vmatprep.subr.mxu0 0.0
    %630 = vmatpush1.msra.mxu0 0.0
    %631 = vmatprep.subr.mxu0 0.0
    %632 = vmatpush1.msra.mxu0 0.0
    %633 = vmatprep.subr.mxu0 0.0
    %634 = vmatpush1.msra.mxu0 0.0
    %635 = vmatprep.subr.mxu0 0.0
    %636 = vmatpush1.msra.mxu0 0.0
    %637 = vmatprep.subr.mxu0 0.0
    %638 = vmatpush1.msra.mxu0 0.0
    %639 = vmatprep.subr.mxu0 0.0
    %640 = vmatpush1.msra.mxu0 0.0
    %641 = vmatprep.subr.mxu0 0.0
    %642 = vmatpush1.msra.mxu0 0.0
    %643 = vmatprep.subr.mxu0 0.0
    %644 = vmatpush1.msra.mxu0 0.0
    %645 = vmatprep.subr.mxu0 0.0
    %646 = vmatpush1.msra.mxu0 0.0
    %647 = vmatprep.subr.mxu0 0.0
    %648 = vmatpush1.msra.mxu0 0.0
    %649 = vmatprep.subr.mxu0 0.0
    %650 = vmatpush1.msra.mxu0 0.0
    %651 = vmatprep.subr.mxu0 0.0
    %652 = vmatpush1.msra.mxu0 0.0
    %653 = vmatprep.subr.mxu0 0.0
    %654 = vmatpush1.msra.mxu0 0.0
    %655 = vmatprep.mubr.f32.mxu0 0.0
    %656 = vmatmul.mubr.f32.gmra.mrb[0].mxu0 %v577
    %v657 = vpop.f32.mrb[0].mxu0
    %v658 = vadd.f32 0.0, %v657
    %v659 = vpop.f32.mrb[0].mxu0
    %v660 = vadd.f32 0.0, %v659
    %661 = vdwg.mxu0
    %662 = vmatprep.subr.mxu0 %v585
    %663 = vmatpush1.msra.mxu0 %v583
    %664 = vmatprep.subr.mxu0 0.0
    %665 = vmatpush1.msra.mxu0 0.0
    %666 = vmatprep.subr.mxu0 0.0
    %667 = vmatpush1.msra.mxu0 0.0
    %668 = vmatprep.subr.mxu0 0.0
    %669 = vmatpush1.msra.mxu0 0.0
    %670 = vmatprep.subr.mxu0 0.0
    %671 = vmatpush1.msra.mxu0 0.0
    %672 = vmatprep.subr.mxu0 0.0
    %673 = vmatpush1.msra.mxu0 0.0
    %674 = vmatprep.subr.mxu0 0.0
    %675 = vmatpush1.msra.mxu0 0.0
    %676 = vmatprep.subr.mxu0 0.0
    %677 = vmatpush1.msra.mxu0 0.0
    %678 = vmatprep.subr.mxu0 0.0
    %679 = vmatpush1.msra.mxu0 0.0
    %680 = vmatprep.subr.mxu0 0.0
    %681 = vmatpush1.msra.mxu0 0.0
    %682 = vmatprep.subr.mxu0 0.0
    %683 = vmatpush1.msra.mxu0 0.0
    %684 = vmatprep.subr.mxu0 0.0
    %685 = vmatpush1.msra.mxu0 0.0
    %686 = vmatprep.subr.mxu0 0.0
    %687 = vmatpush1.msra.mxu0 0.0
    %688 = vmatprep.subr.mxu0 0.0
    %689 = vmatpush1.msra.mxu0 0.0
    %690 = vmatprep.subr.mxu0 0.0
    %691 = vmatpush1.msra.mxu0 0.0
    %692 = vmatprep.subr.mxu0 0.0
    %693 = vmatpush1.msra.mxu0 0.0
    %694 = vmatprep.subr.mxu0 0.0
    %695 = vmatpush1.msra.mxu0 0.0
    %696 = vmatprep.subr.mxu0 0.0
    %697 = vmatpush1.msra.mxu0 0.0
    %698 = vmatprep.subr.mxu0 0.0
    %699 = vmatpush1.msra.mxu0 0.0
    %700 = vmatprep.subr.mxu0 0.0
    %701 = vmatpush1.msra.mxu0 0.0
    %702 = vmatprep.subr.mxu0 0.0
    %703 = vmatpush1.msra.mxu0 0.0
    %704 = vmatprep.subr.mxu0 0.0
    %705 = vmatpush1.msra.mxu0 0.0
    %706 = vmatprep.subr.mxu0 0.0
    %707 = vmatpush1.msra.mxu0 0.0
    %708 = vmatprep.subr.mxu0 0.0
    %709 = vmatpush1.msra.mxu0 0.0
    %710 = vmatprep.subr.mxu0 0.0
    %711 = vmatpush1.msra.mxu0 0.0
    %712 = vmatprep.subr.mxu0 0.0
    %713 = vmatpush1.msra.mxu0 0.0
    %714 = vmatprep.subr.mxu0 0.0
    %715 = vmatpush1.msra.mxu0 0.0
    %716 = vmatprep.subr.mxu0 0.0
    %717 = vmatpush1.msra.mxu0 0.0
    %718 = vmatprep.subr.mxu0 0.0
    %719 = vmatpush1.msra.mxu0 0.0
    %720 = vmatprep.subr.mxu0 0.0
    %721 = vmatpush1.msra.mxu0 0.0
    %722 = vmatprep.subr.mxu0 0.0
    %723 = vmatpush1.msra.mxu0 0.0
    %724 = vmatprep.subr.mxu0 0.0
    %725 = vmatpush1.msra.mxu0 0.0
    %726 = vmatprep.mubr.f32.mxu0 0.0
    %727 = vmatmul.mubr.f32.gmra.mrb[0].mxu0 %v577
    %v728 = vpop.f32.mrb[0].mxu0
    %v729 = vadd.f32 0.0, %v728
    %v730 = vpop.f32.mrb[0].mxu0
    %v731 = vadd.f32 0.0, %v730
    %732 = vdwg.mxu0
    %733 = vmatprep.subr.mxu0 %v589
    %734 = vmatpush1.msra.mxu0 %v587
    %735 = vmatprep.subr.mxu0 0.0
    %736 = vmatpush1.msra.mxu0 0.0
    %737 = vmatprep.subr.mxu0 0.0
    %738 = vmatpush1.msra.mxu0 0.0
    %739 = vmatprep.subr.mxu0 0.0
    %740 = vmatpush1.msra.mxu0 0.0
    %741 = vmatprep.subr.mxu0 0.0
    %742 = vmatpush1.msra.mxu0 0.0
    %743 = vmatprep.subr.mxu0 0.0
    %744 = vmatpush1.msra.mxu0 0.0
    %745 = vmatprep.subr.mxu0 0.0
    %746 = vmatpush1.msra.mxu0 0.0
    %747 = vmatprep.subr.mxu0 0.0
    %748 = vmatpush1.msra.mxu0 0.0
    %749 = vmatprep.subr.mxu0 0.0
    %750 = vmatpush1.msra.mxu0 0.0
    %751 = vmatprep.subr.mxu0 0.0
    %752 = vmatpush1.msra.mxu0 0.0
    %753 = vmatprep.subr.mxu0 0.0
    %754 = vmatpush1.msra.mxu0 0.0
    %755 = vmatprep.subr.mxu0 0.0
    %756 = vmatpush1.msra.mxu0 0.0
    %757 = vmatprep.subr.mxu0 0.0
    %758 = vmatpush1.msra.mxu0 0.0
    %759 = vmatprep.subr.mxu0 0.0
    %760 = vmatpush1.msra.mxu0 0.0
    %761 = vmatprep.subr.mxu0 0.0
    %762 = vmatpush1.msra.mxu0 0.0
    %763 = vmatprep.subr.mxu0 0.0
    %764 = vmatpush1.msra.mxu0 0.0
    %765 = vmatprep.subr.mxu0 0.0
    %766 = vmatpush1.msra.mxu0 0.0
    %767 = vmatprep.subr.mxu0 0.0
    %768 = vmatpush1.msra.mxu0 0.0
    %769 = vmatprep.subr.mxu0 0.0
    %770 = vmatpush1.msra.mxu0 0.0
    %771 = vmatprep.subr.mxu0 0.0
    %772 = vmatpush1.msra.mxu0 0.0
    %773 = vmatprep.subr.mxu0 0.0
    %774 = vmatpush1.msra.mxu0 0.0
    %775 = vmatprep.subr.mxu0 0.0
    %776 = vmatpush1.msra.mxu0 0.0
    %777 = vmatprep.subr.mxu0 0.0
    %778 = vmatpush1.msra.mxu0 0.0
    %779 = vmatprep.subr.mxu0 0.0
    %780 = vmatpush1.msra.mxu0 0.0
    %781 = vmatprep.subr.mxu0 0.0
    %782 = vmatpush1.msra.mxu0 0.0
    %783 = vmatprep.subr.mxu0 0.0
    %784 = vmatpush1.msra.mxu0 0.0
    %785 = vmatprep.subr.mxu0 0.0
    %786 = vmatpush1.msra.mxu0 0.0
    %787 = vmatprep.subr.mxu0 0.0
    %788 = vmatpush1.msra.mxu0 0.0
    %789 = vmatprep.subr.mxu0 0.0
    %790 = vmatpush1.msra.mxu0 0.0
    %791 = vmatprep.subr.mxu0 0.0
    %792 = vmatpush1.msra.mxu0 0.0
    %793 = vmatprep.subr.mxu0 0.0
    %794 = vmatpush1.msra.mxu0 0.0
    %795 = vmatprep.subr.mxu0 0.0
    %796 = vmatpush1.msra.mxu0 0.0
    %797 = vmatprep.mubr.f32.mxu0 0.0
    %798 = vmatmul.mubr.f32.gmra.mrb[0].mxu0 %v577
    %v799 = vpop.f32.mrb[0].mxu0
    %v800 = vadd.f32 0.0, %v799
    %v801 = vpop.f32.mrb[0].mxu0
    %v802 = vadd.f32 0.0, %v801
    %803 = vdwg.mxu0
    %v804 = vadd.f32 %v397, %v658
    %v805 = vadd.f32 %v399, %v660
    %v806 = vadd.f32 %v468, %v729
    %v807 = vadd.f32 %v470, %v731
    %v808 = vadd.f32 %v539, %v800
    %v809 = vadd.f32 %v541, %v802
    %v810 = vld [vmem:[#allocation2] sm:$0xff]
    %v811 = vld [vmem:[#allocation2 + $0x8] sm:$0xff]
    %v812 = vld [vmem:[#allocation2 + $0x10] sm:$0xff]
    %v813 = vld [vmem:[#allocation2 + $0x18] sm:$0xf]
    %814 = vrot.lane.b32.xlu0 %v30, 116
    %v815 = vpop.permute.xlu0 %814
    %v820 = vcombine.high %v810, %v810
    %v821 = vcombine.high %v811, %v811
    %v822 = vcombine.high %v812, %v812
    %823 = vrot.lane.b32.xlu0 %v810, 1
    %v824 = vpop.permute.xlu0 %823
    %825 = vrot.lane.b32.xlu0 %v820, 1
    %v826 = vpop.permute.xlu0 %825
    %827 = vrot.lane.b32.xlu0 %v811, 1
    %v828 = vpop.permute.xlu0 %827
    %829 = vrot.lane.b32.xlu0 %v821, 1
    %v830 = vpop.permute.xlu0 %829
    %831 = vrot.lane.b32.xlu0 %v812, 1
    %v832 = vpop.permute.xlu0 %831
    %833 = vrot.lane.b32.xlu0 %v822, 1
    %v834 = vpop.permute.xlu0 %833
    %835 = vrot.lane.b32.xlu0 %v813, 1
    %v836 = vpop.permute.xlu0 %835
    %vm837 = vcmask 7168
    %v838 = vsel %vm837, %v824, %v826
    %v839 = vsel %vm837, %v826, %v828
    %v840 = vsel %vm837, %v828, %v830
    %v841 = vsel %vm837, %v830, %v832
    %v842 = vsel %vm837, %v832, %v834
    %v843 = vsel %vm837, %v834, %v836
    %v844 = vsel %vm66, %v815, 0
    %v846 = vsel %vm69, %v838, 0
    %v848 = vsel %vm69, %v839, 0
    %v850 = vsel %vm69, %v840, 0
    %v852 = vsel %vm69, %v841, 0
    %v854 = vsel %vm69, %v842, 0
    %v856 = vsel %vm69, %v843, 0
    %858 = vmatprep.subr.mxu0 %v848
    %859 = vmatpush1.msra.mxu0 %v846
    %860 = vmatprep.subr.mxu0 0.0
    %861 = vmatpush1.msra.mxu0 0.0
    %862 = vmatprep.subr.mxu0 0.0
    %863 = vmatpush1.msra.mxu0 0.0
    %864 = vmatprep.subr.mxu0 0.0
    %865 = vmatpush1.msra.mxu0 0.0
    %866 = vmatprep.subr.mxu0 0.0
    %867 = vmatpush1.msra.mxu0 0.0
    %868 = vmatprep.subr.mxu0 0.0
    %869 = vmatpush1.msra.mxu0 0.0
    %870 = vmatprep.subr.mxu0 0.0
    %871 = vmatpush1.msra.mxu0 0.0
    %872 = vmatprep.subr.mxu0 0.0
    %873 = vmatpush1.msra.mxu0 0.0
    %874 = vmatprep.subr.mxu0 0.0
    %875 = vmatpush1.msra.mxu0 0.0
    %876 = vmatprep.subr.mxu0 0.0
    %877 = vmatpush1.msra.mxu0 0.0
    %878 = vmatprep.subr.mxu0 0.0
    %879 = vmatpush1.msra.mxu0 0.0
    %880 = vmatprep.subr.mxu0 0.0
    %881 = vmatpush1.msra.mxu0 0.0
    %882 = vmatprep.subr.mxu0 0.0
    %883 = vmatpush1.msra.mxu0 0.0
    %884 = vmatprep.subr.mxu0 0.0
    %885 = vmatpush1.msra.mxu0 0.0
    %886 = vmatprep.subr.mxu0 0.0
    %887 = vmatpush1.msra.mxu0 0.0
    %888 = vmatprep.subr.mxu0 0.0
    %889 = vmatpush1.msra.mxu0 0.0
    %890 = vmatprep.subr.mxu0 0.0
    %891 = vmatpush1.msra.mxu0 0.0
    %892 = vmatprep.subr.mxu0 0.0
    %893 = vmatpush1.msra.mxu0 0.0
    %894 = vmatprep.subr.mxu0 0.0
    %895 = vmatpush1.msra.mxu0 0.0
    %896 = vmatprep.subr.mxu0 0.0
    %897 = vmatpush1.msra.mxu0 0.0
    %898 = vmatprep.subr.mxu0 0.0
    %899 = vmatpush1.msra.mxu0 0.0
    %900 = vmatprep.subr.mxu0 0.0
    %901 = vmatpush1.msra.mxu0 0.0
    %902 = vmatprep.subr.mxu0 0.0
    %903 = vmatpush1.msra.mxu0 0.0
    %904 = vmatprep.subr.mxu0 0.0
    %905 = vmatpush1.msra.mxu0 0.0
    %906 = vmatprep.subr.mxu0 0.0
    %907 = vmatpush1.msra.mxu0 0.0
    %908 = vmatprep.subr.mxu0 0.0
    %909 = vmatpush1.msra.mxu0 0.0
    %910 = vmatprep.subr.mxu0 0.0
    %911 = vmatpush1.msra.mxu0 0.0
    %912 = vmatprep.subr.mxu0 0.0
    %913 = vmatpush1.msra.mxu0 0.0
    %914 = vmatprep.subr.mxu0 0.0
    %915 = vmatpush1.msra.mxu0 0.0
    %916 = vmatprep.subr.mxu0 0.0
    %917 = vmatpush1.msra.mxu0 0.0
    %918 = vmatprep.subr.mxu0 0.0
    %919 = vmatpush1.msra.mxu0 0.0
    %920 = vmatprep.subr.mxu0 0.0
    %921 = vmatpush1.msra.mxu0 0.0
    %922 = vmatprep.mubr.f32.mxu0 0.0
    %923 = vmatmul.mubr.f32.gmra.mrb[0].mxu0 %v844
    %v924 = vpop.f32.mrb[0].mxu0
    %v925 = vadd.f32 0.0, %v924
    %v926 = vpop.f32.mrb[0].mxu0
    %v927 = vadd.f32 0.0, %v926
    %928 = vdwg.mxu0
    %929 = vmatprep.subr.mxu0 %v852
    %930 = vmatpush1.msra.mxu0 %v850
    %931 = vmatprep.subr.mxu0 0.0
    %932 = vmatpush1.msra.mxu0 0.0
    %933 = vmatprep.subr.mxu0 0.0
    %934 = vmatpush1.msra.mxu0 0.0
    %935 = vmatprep.subr.mxu0 0.0
    %936 = vmatpush1.msra.mxu0 0.0
    %937 = vmatprep.subr.mxu0 0.0
    %938 = vmatpush1.msra.mxu0 0.0
    %939 = vmatprep.subr.mxu0 0.0
    %940 = vmatpush1.msra.mxu0 0.0
    %941 = vmatprep.subr.mxu0 0.0
    %942 = vmatpush1.msra.mxu0 0.0
    %943 = vmatprep.subr.mxu0 0.0
    %944 = vmatpush1.msra.mxu0 0.0
    %945 = vmatprep.subr.mxu0 0.0
    %946 = vmatpush1.msra.mxu0 0.0
    %947 = vmatprep.subr.mxu0 0.0
    %948 = vmatpush1.msra.mxu0 0.0
    %949 = vmatprep.subr.mxu0 0.0
    %950 = vmatpush1.msra.mxu0 0.0
    %951 = vmatprep.subr.mxu0 0.0
    %952 = vmatpush1.msra.mxu0 0.0
    %953 = vmatprep.subr.mxu0 0.0
    %954 = vmatpush1.msra.mxu0 0.0
    %955 = vmatprep.subr.mxu0 0.0
    %956 = vmatpush1.msra.mxu0 0.0
    %957 = vmatprep.subr.mxu0 0.0
    %958 = vmatpush1.msra.mxu0 0.0
    %959 = vmatprep.subr.mxu0 0.0
    %960 = vmatpush1.msra.mxu0 0.0
    %961 = vmatprep.subr.mxu0 0.0
    %962 = vmatpush1.msra.mxu0 0.0
    %963 = vmatprep.subr.mxu0 0.0
    %964 = vmatpush1.msra.mxu0 0.0
    %965 = vmatprep.subr.mxu0 0.0
    %966 = vmatpush1.msra.mxu0 0.0
    %967 = vmatprep.subr.mxu0 0.0
    %968 = vmatpush1.msra.mxu0 0.0
    %969 = vmatprep.subr.mxu0 0.0
    %970 = vmatpush1.msra.mxu0 0.0
    %971 = vmatprep.subr.mxu0 0.0
    %972 = vmatpush1.msra.mxu0 0.0
    %973 = vmatprep.subr.mxu0 0.0
    %974 = vmatpush1.msra.mxu0 0.0
    %975 = vmatprep.subr.mxu0 0.0
    %976 = vmatpush1.msra.mxu0 0.0
    %977 = vmatprep.subr.mxu0 0.0
    %978 = vmatpush1.msra.mxu0 0.0
    %979 = vmatprep.subr.mxu0 0.0
    %980 = vmatpush1.msra.mxu0 0.0
    %981 = vmatprep.subr.mxu0 0.0
    %982 = vmatpush1.msra.mxu0 0.0
    %983 = vmatprep.subr.mxu0 0.0
    %984 = vmatpush1.msra.mxu0 0.0
    %985 = vmatprep.subr.mxu0 0.0
    %986 = vmatpush1.msra.mxu0 0.0
    %987 = vmatprep.subr.mxu0 0.0
    %988 = vmatpush1.msra.mxu0 0.0
    %989 = vmatprep.subr.mxu0 0.0
    %990 = vmatpush1.msra.mxu0 0.0
    %991 = vmatprep.subr.mxu0 0.0
    %992 = vmatpush1.msra.mxu0 0.0
    %993 = vmatprep.mubr.f32.mxu0 0.0
    %994 = vmatmul.mubr.f32.gmra.mrb[0].mxu0 %v844
    %v995 = vpop.f32.mrb[0].mxu0
    %v996 = vadd.f32 0.0, %v995
    %v997 = vpop.f32.mrb[0].mxu0
    %v998 = vadd.f32 0.0, %v997
    %999 = vdwg.mxu0
    %1000 = vmatprep.subr.mxu0 %v856
    %1001 = vmatpush1.msra.mxu0 %v854
    %1002 = vmatprep.subr.mxu0 0.0
    %1003 = vmatpush1.msra.mxu0 0.0
    %1004 = vmatprep.subr.mxu0 0.0
    %1005 = vmatpush1.msra.mxu0 0.0
    %1006 = vmatprep.subr.mxu0 0.0
    %1007 = vmatpush1.msra.mxu0 0.0
    %1008 = vmatprep.subr.mxu0 0.0
    %1009 = vmatpush1.msra.mxu0 0.0
    %1010 = vmatprep.subr.mxu0 0.0
    %1011 = vmatpush1.msra.mxu0 0.0
    %1012 = vmatprep.subr.mxu0 0.0
    %1013 = vmatpush1.msra.mxu0 0.0
    %1014 = vmatprep.subr.mxu0 0.0
    %1015 = vmatpush1.msra.mxu0 0.0
    %1016 = vmatprep.subr.mxu0 0.0
    %1017 = vmatpush1.msra.mxu0 0.0
    %1018 = vmatprep.subr.mxu0 0.0
    %1019 = vmatpush1.msra.mxu0 0.0
    %1020 = vmatprep.subr.mxu0 0.0
    %1021 = vmatpush1.msra.mxu0 0.0
    %1022 = vmatprep.subr.mxu0 0.0
    %1023 = vmatpush1.msra.mxu0 0.0
    %1024 = vmatprep.subr.mxu0 0.0
    %1025 = vmatpush1.msra.mxu0 0.0
    %1026 = vmatprep.subr.mxu0 0.0
    %1027 = vmatpush1.msra.mxu0 0.0
    %1028 = vmatprep.subr.mxu0 0.0
    %1029 = vmatpush1.msra.mxu0 0.0
    %1030 = vmatprep.subr.mxu0 0.0
    %1031 = vmatpush1.msra.mxu0 0.0
    %1032 = vmatprep.subr.mxu0 0.0
    %1033 = vmatpush1.msra.mxu0 0.0
    %1034 = vmatprep.subr.mxu0 0.0
    %1035 = vmatpush1.msra.mxu0 0.0
    %1036 = vmatprep.subr.mxu0 0.0
    %1037 = vmatpush1.msra.mxu0 0.0
    %1038 = vmatprep.subr.mxu0 0.0
    %1039 = vmatpush1.msra.mxu0 0.0
    %1040 = vmatprep.subr.mxu0 0.0
    %1041 = vmatpush1.msra.mxu0 0.0
    %1042 = vmatprep.subr.mxu0 0.0
    %1043 = vmatpush1.msra.mxu0 0.0
    %1044 = vmatprep.subr.mxu0 0.0
    %1045 = vmatpush1.msra.mxu0 0.0
    %1046 = vmatprep.subr.mxu0 0.0
    %1047 = vmatpush1.msra.mxu0 0.0
    %1048 = vmatprep.subr.mxu0 0.0
    %1049 = vmatpush1.msra.mxu0 0.0
    %1050 = vmatprep.subr.mxu0 0.0
    %1051 = vmatpush1.msra.mxu0 0.0
    %1052 = vmatprep.subr.mxu0 0.0
    %1053 = vmatpush1.msra.mxu0 0.0
    %1054 = vmatprep.subr.mxu0 0.0
    %1055 = vmatpush1.msra.mxu0 0.0
    %1056 = vmatprep.subr.mxu0 0.0
    %1057 = vmatpush1.msra.mxu0 0.0
    %1058 = vmatprep.subr.mxu0 0.0
    %1059 = vmatpush1.msra.mxu0 0.0
    %1060 = vmatprep.subr.mxu0 0.0
    %1061 = vmatpush1.msra.mxu0 0.0
    %1062 = vmatprep.subr.mxu0 0.0
    %1063 = vmatpush1.msra.mxu0 0.0
    %1064 = vmatprep.mubr.f32.mxu0 0.0
    %1065 = vmatmul.mubr.f32.gmra.mrb[0].mxu0 %v844
    %v1066 = vpop.f32.mrb[0].mxu0
    %v1067 = vadd.f32 0.0, %v1066
    %v1068 = vpop.f32.mrb[0].mxu0
    %v1069 = vadd.f32 0.0, %v1068
    %1070 = vdwg.mxu0
    %v1071 = vadd.f32 %v804, %v925
    %v1072 = vadd.f32 %v805, %v927
    %v1073 = vadd.f32 %v806, %v996
    %v1074 = vadd.f32 %v807, %v998
    %v1075 = vadd.f32 %v808, %v1067
    %v1076 = vadd.f32 %v809, %v1069
    %v1077 = vld [vmem:[#allocation2 + $0x4] sm:$0xff]
    %v1078 = vld [vmem:[#allocation2 + $0xc] sm:$0xff]
    %v1079 = vld [vmem:[#allocation2 + $0x14] sm:$0xff]
    %1080 = vrot.lane.b32.xlu0 %v30, 112
    %v1081 = vpop.permute.xlu0 %1080
    %v1085 = vcombine.high %v1077, %v1077
    %v1086 = vcombine.high %v1078, %v1078
    %v1087 = vcombine.high %v1079, %v1079
    %v1088 = vsel %vm66, %v1081, 0
    %v1090 = vsel %vm69, %v1077, 0
    %v1092 = vsel %vm69, %v1085, 0
    %v1094 = vsel %vm69, %v1078, 0
    %v1096 = vsel %vm69, %v1086, 0
    %v1098 = vsel %vm69, %v1079, 0
    %v1100 = vsel %vm69, %v1087, 0
    %1102 = vmatprep.subr.mxu0 %v1092
    %1103 = vmatpush1.msra.mxu0 %v1090
    %1104 = vmatprep.subr.mxu0 0.0
    %1105 = vmatpush1.msra.mxu0 0.0
    %1106 = vmatprep.subr.mxu0 0.0
    %1107 = vmatpush1.msra.mxu0 0.0
    %1108 = vmatprep.subr.mxu0 0.0
    %1109 = vmatpush1.msra.mxu0 0.0
    %1110 = vmatprep.subr.mxu0 0.0
    %1111 = vmatpush1.msra.mxu0 0.0
    %1112 = vmatprep.subr.mxu0 0.0
    %1113 = vmatpush1.msra.mxu0 0.0
    %1114 = vmatprep.subr.mxu0 0.0
    %1115 = vmatpush1.msra.mxu0 0.0
    %1116 = vmatprep.subr.mxu0 0.0
    %1117 = vmatpush1.msra.mxu0 0.0
    %1118 = vmatprep.subr.mxu0 0.0
    %1119 = vmatpush1.msra.mxu0 0.0
    %1120 = vmatprep.subr.mxu0 0.0
    %1121 = vmatpush1.msra.mxu0 0.0
    %1122 = vmatprep.subr.mxu0 0.0
    %1123 = vmatpush1.msra.mxu0 0.0
    %1124 = vmatprep.subr.mxu0 0.0
    %1125 = vmatpush1.msra.mxu0 0.0
    %1126 = vmatprep.subr.mxu0 0.0
    %1127 = vmatpush1.msra.mxu0 0.0
    %1128 = vmatprep.subr.mxu0 0.0
    %1129 = vmatpush1.msra.mxu0 0.0
    %1130 = vmatprep.subr.mxu0 0.0
    %1131 = vmatpush1.msra.mxu0 0.0
    %1132 = vmatprep.subr.mxu0 0.0
    %1133 = vmatpush1.msra.mxu0 0.0
    %1134 = vmatprep.subr.mxu0 0.0
    %1135 = vmatpush1.msra.mxu0 0.0
    %1136 = vmatprep.subr.mxu0 0.0
    %1137 = vmatpush1.msra.mxu0 0.0
    %1138 = vmatprep.subr.mxu0 0.0
    %1139 = vmatpush1.msra.mxu0 0.0
    %1140 = vmatprep.subr.mxu0 0.0
    %1141 = vmatpush1.msra.mxu0 0.0
    %1142 = vmatprep.subr.mxu0 0.0
    %1143 = vmatpush1.msra.mxu0 0.0
    %1144 = vmatprep.subr.mxu0 0.0
    %1145 = vmatpush1.msra.mxu0 0.0
    %1146 = vmatprep.subr.mxu0 0.0
    %1147 = vmatpush1.msra.mxu0 0.0
    %1148 = vmatprep.subr.mxu0 0.0
    %1149 = vmatpush1.msra.mxu0 0.0
    %1150 = vmatprep.subr.mxu0 0.0
    %1151 = vmatpush1.msra.mxu0 0.0
    %1152 = vmatprep.subr.mxu0 0.0
    %1153 = vmatpush1.msra.mxu0 0.0
    %1154 = vmatprep.subr.mxu0 0.0
    %1155 = vmatpush1.msra.mxu0 0.0
    %1156 = vmatprep.subr.mxu0 0.0
    %1157 = vmatpush1.msra.mxu0 0.0
    %1158 = vmatprep.subr.mxu0 0.0
    %1159 = vmatpush1.msra.mxu0 0.0
    %1160 = vmatprep.subr.mxu0 0.0
    %1161 = vmatpush1.msra.mxu0 0.0
    %1162 = vmatprep.subr.mxu0 0.0
    %1163 = vmatpush1.msra.mxu0 0.0
    %1164 = vmatprep.subr.mxu0 0.0
    %1165 = vmatpush1.msra.mxu0 0.0
    %1166 = vmatprep.mubr.f32.mxu0 0.0
    %1167 = vmatmul.mubr.f32.gmra.mrb[0].mxu0 %v1088
    %v1168 = vpop.f32.mrb[0].mxu0
    %v1169 = vadd.f32 0.0, %v1168
    %v1170 = vpop.f32.mrb[0].mxu0
    %v1171 = vadd.f32 0.0, %v1170
    %1172 = vdwg.mxu0
    %1173 = vmatprep.subr.mxu0 %v1096
    %1174 = vmatpush1.msra.mxu0 %v1094
    %1175 = vmatprep.subr.mxu0 0.0
    %1176 = vmatpush1.msra.mxu0 0.0
    %1177 = vmatprep.subr.mxu0 0.0
    %1178 = vmatpush1.msra.mxu0 0.0
    %1179 = vmatprep.subr.mxu0 0.0
    %1180 = vmatpush1.msra.mxu0 0.0
    %1181 = vmatprep.subr.mxu0 0.0
    %1182 = vmatpush1.msra.mxu0 0.0
    %1183 = vmatprep.subr.mxu0 0.0
    %1184 = vmatpush1.msra.mxu0 0.0
    %1185 = vmatprep.subr.mxu0 0.0
    %1186 = vmatpush1.msra.mxu0 0.0
    %1187 = vmatprep.subr.mxu0 0.0
    %1188 = vmatpush1.msra.mxu0 0.0
    %1189 = vmatprep.subr.mxu0 0.0
    %1190 = vmatpush1.msra.mxu0 0.0
    %1191 = vmatprep.subr.mxu0 0.0
    %1192 = vmatpush1.msra.mxu0 0.0
    %1193 = vmatprep.subr.mxu0 0.0
    %1194 = vmatpush1.msra.mxu0 0.0
    %1195 = vmatprep.subr.mxu0 0.0
    %1196 = vmatpush1.msra.mxu0 0.0
    %1197 = vmatprep.subr.mxu0 0.0
    %1198 = vmatpush1.msra.mxu0 0.0
    %1199 = vmatprep.subr.mxu0 0.0
    %1200 = vmatpush1.msra.mxu0 0.0
    %1201 = vmatprep.subr.mxu0 0.0
    %1202 = vmatpush1.msra.mxu0 0.0
    %1203 = vmatprep.subr.mxu0 0.0
    %1204 = vmatpush1.msra.mxu0 0.0
    %1205 = vmatprep.subr.mxu0 0.0
    %1206 = vmatpush1.msra.mxu0 0.0
    %1207 = vmatprep.subr.mxu0 0.0
    %1208 = vmatpush1.msra.mxu0 0.0
    %1209 = vmatprep.subr.mxu0 0.0
    %1210 = vmatpush1.msra.mxu0 0.0
    %1211 = vmatprep.subr.mxu0 0.0
    %1212 = vmatpush1.msra.mxu0 0.0
    %1213 = vmatprep.subr.mxu0 0.0
    %1214 = vmatpush1.msra.mxu0 0.0
    %1215 = vmatprep.subr.mxu0 0.0
    %1216 = vmatpush1.msra.mxu0 0.0
    %1217 = vmatprep.subr.mxu0 0.0
    %1218 = vmatpush1.msra.mxu0 0.0
    %1219 = vmatprep.subr.mxu0 0.0
    %1220 = vmatpush1.msra.mxu0 0.0
    %1221 = vmatprep.subr.mxu0 0.0
    %1222 = vmatpush1.msra.mxu0 0.0
    %1223 = vmatprep.subr.mxu0 0.0
    %1224 = vmatpush1.msra.mxu0 0.0
    %1225 = vmatprep.subr.mxu0 0.0
    %1226 = vmatpush1.msra.mxu0 0.0
    %1227 = vmatprep.subr.mxu0 0.0
    %1228 = vmatpush1.msra.mxu0 0.0
    %1229 = vmatprep.subr.mxu0 0.0
    %1230 = vmatpush1.msra.mxu0 0.0
    %1231 = vmatprep.subr.mxu0 0.0
    %1232 = vmatpush1.msra.mxu0 0.0
    %1233 = vmatprep.subr.mxu0 0.0
    %1234 = vmatpush1.msra.mxu0 0.0
    %1235 = vmatprep.subr.mxu0 0.0
    %1236 = vmatpush1.msra.mxu0 0.0
    %1237 = vmatprep.mubr.f32.mxu0 0.0
    %1238 = vmatmul.mubr.f32.gmra.mrb[0].mxu0 %v1088
    %v1239 = vpop.f32.mrb[0].mxu0
    %v1240 = vadd.f32 0.0, %v1239
    %v1241 = vpop.f32.mrb[0].mxu0
    %v1242 = vadd.f32 0.0, %v1241
    %1243 = vdwg.mxu0
    %1244 = vmatprep.subr.mxu0 %v1100
    %1245 = vmatpush1.msra.mxu0 %v1098
    %1246 = vmatprep.subr.mxu0 0.0
    %1247 = vmatpush1.msra.mxu0 0.0
    %1248 = vmatprep.subr.mxu0 0.0
    %1249 = vmatpush1.msra.mxu0 0.0
    %1250 = vmatprep.subr.mxu0 0.0
    %1251 = vmatpush1.msra.mxu0 0.0
    %1252 = vmatprep.subr.mxu0 0.0
    %1253 = vmatpush1.msra.mxu0 0.0
    %1254 = vmatprep.subr.mxu0 0.0
    %1255 = vmatpush1.msra.mxu0 0.0
    %1256 = vmatprep.subr.mxu0 0.0
    %1257 = vmatpush1.msra.mxu0 0.0
    %1258 = vmatprep.subr.mxu0 0.0
    %1259 = vmatpush1.msra.mxu0 0.0
    %1260 = vmatprep.subr.mxu0 0.0
    %1261 = vmatpush1.msra.mxu0 0.0
    %1262 = vmatprep.subr.mxu0 0.0
    %1263 = vmatpush1.msra.mxu0 0.0
    %1264 = vmatprep.subr.mxu0 0.0
    %1265 = vmatpush1.msra.mxu0 0.0
    %1266 = vmatprep.subr.mxu0 0.0
    %1267 = vmatpush1.msra.mxu0 0.0
    %1268 = vmatprep.subr.mxu0 0.0
    %1269 = vmatpush1.msra.mxu0 0.0
    %1270 = vmatprep.subr.mxu0 0.0
    %1271 = vmatpush1.msra.mxu0 0.0
    %1272 = vmatprep.subr.mxu0 0.0
    %1273 = vmatpush1.msra.mxu0 0.0
    %1274 = vmatprep.subr.mxu0 0.0
    %1275 = vmatpush1.msra.mxu0 0.0
    %1276 = vmatprep.subr.mxu0 0.0
    %1277 = vmatpush1.msra.mxu0 0.0
    %1278 = vmatprep.subr.mxu0 0.0
    %1279 = vmatpush1.msra.mxu0 0.0
    %1280 = vmatprep.subr.mxu0 0.0
    %1281 = vmatpush1.msra.mxu0 0.0
    %1282 = vmatprep.subr.mxu0 0.0
    %1283 = vmatpush1.msra.mxu0 0.0
    %1284 = vmatprep.subr.mxu0 0.0
    %1285 = vmatpush1.msra.mxu0 0.0
    %1286 = vmatprep.subr.mxu0 0.0
    %1287 = vmatpush1.msra.mxu0 0.0
    %1288 = vmatprep.subr.mxu0 0.0
    %1289 = vmatpush1.msra.mxu0 0.0
    %1290 = vmatprep.subr.mxu0 0.0
    %1291 = vmatpush1.msra.mxu0 0.0
    %1292 = vmatprep.subr.mxu0 0.0
    %1293 = vmatpush1.msra.mxu0 0.0
    %1294 = vmatprep.subr.mxu0 0.0
    %1295 = vmatpush1.msra.mxu0 0.0
    %1296 = vmatprep.subr.mxu0 0.0
    %1297 = vmatpush1.msra.mxu0 0.0
    %1298 = vmatprep.subr.mxu0 0.0
    %1299 = vmatpush1.msra.mxu0 0.0
    %1300 = vmatprep.subr.mxu0 0.0
    %1301 = vmatpush1.msra.mxu0 0.0
    %1302 = vmatprep.subr.mxu0 0.0
    %1303 = vmatpush1.msra.mxu0 0.0
    %1304 = vmatprep.subr.mxu0 0.0
    %1305 = vmatpush1.msra.mxu0 0.0
    %1306 = vmatprep.subr.mxu0 0.0
    %1307 = vmatpush1.msra.mxu0 0.0
    %1308 = vmatprep.mubr.f32.mxu0 0.0
    %1309 = vmatmul.mubr.f32.gmra.mrb[0].mxu0 %v1088
    %v1310 = vpop.f32.mrb[0].mxu0
    %v1311 = vadd.f32 0.0, %v1310
    %v1312 = vpop.f32.mrb[0].mxu0
    %v1313 = vadd.f32 0.0, %v1312
    %1314 = vdwg.mxu0
    %v1315 = vadd.f32 %v1071, %v1169
    %v1316 = vadd.f32 %v1072, %v1171
    %v1317 = vadd.f32 %v1073, %v1240
    %v1318 = vadd.f32 %v1074, %v1242
    %v1319 = vadd.f32 %v1075, %v1311
    %v1320 = vadd.f32 %v1076, %v1313
    %v1321 = vld [vmem:[#allocation2 + $0x4] sm:$0xff]
    %v1322 = vld [vmem:[#allocation2 + $0xc] sm:$0xff]
    %v1323 = vld [vmem:[#allocation2 + $0x14] sm:$0xff]
    %v1324 = vld [vmem:[#allocation2 + $0x1c] sm:$0xf]
    %1325 = vrot.lane.b32.xlu0 %v30, 108
    %v1326 = vpop.permute.xlu0 %1325
    %v1331 = vcombine.high %v1321, %v1321
    %v1332 = vcombine.high %v1322, %v1322
    %v1333 = vcombine.high %v1323, %v1323
    %1334 = vrot.lane.b32.xlu0 %v1321, 127
    %v1335 = vpop.permute.xlu0 %1334
    %1336 = vrot.lane.b32.xlu0 %v1331, 127
    %v1337 = vpop.permute.xlu0 %1336
    %1338 = vrot.lane.b32.xlu0 %v1322, 127
    %v1339 = vpop.permute.xlu0 %1338
    %1340 = vrot.lane.b32.xlu0 %v1332, 127
    %v1341 = vpop.permute.xlu0 %1340
    %1342 = vrot.lane.b32.xlu0 %v1323, 127
    %v1343 = vpop.permute.xlu0 %1342
    %1344 = vrot.lane.b32.xlu0 %v1333, 127
    %v1345 = vpop.permute.xlu0 %1344
    %1346 = vrot.lane.b32.xlu0 %v1324, 127
    %v1347 = vpop.permute.xlu0 %1346
    %vm1348 = vcmask 1039360
    %v1349 = vsel %vm1348, %v1335, %v1337
    %v1350 = vsel %vm1348, %v1337, %v1339
    %v1351 = vsel %vm1348, %v1339, %v1341
    %v1352 = vsel %vm1348, %v1341, %v1343
    %v1353 = vsel %vm1348, %v1343, %v1345
    %v1354 = vsel %vm1348, %v1345, %v1347
    %v1355 = vsel %vm66, %v1326, 0
    %v1357 = vsel %vm69, %v1349, 0
    %v1359 = vsel %vm69, %v1350, 0
    %v1361 = vsel %vm69, %v1351, 0
    %v1363 = vsel %vm69, %v1352, 0
    %v1365 = vsel %vm69, %v1353, 0
    %v1367 = vsel %vm69, %v1354, 0
    %1369 = vmatprep.subr.mxu0 %v1359
    %1370 = vmatpush1.msra.mxu0 %v1357
    %1371 = vmatprep.subr.mxu0 0.0
    %1372 = vmatpush1.msra.mxu0 0.0
    %1373 = vmatprep.subr.mxu0 0.0
    %1374 = vmatpush1.msra.mxu0 0.0
    %1375 = vmatprep.subr.mxu0 0.0
    %1376 = vmatpush1.msra.mxu0 0.0
    %1377 = vmatprep.subr.mxu0 0.0
    %1378 = vmatpush1.msra.mxu0 0.0
    %1379 = vmatprep.subr.mxu0 0.0
    %1380 = vmatpush1.msra.mxu0 0.0
    %1381 = vmatprep.subr.mxu0 0.0
    %1382 = vmatpush1.msra.mxu0 0.0
    %1383 = vmatprep.subr.mxu0 0.0
    %1384 = vmatpush1.msra.mxu0 0.0
    %1385 = vmatprep.subr.mxu0 0.0
    %1386 = vmatpush1.msra.mxu0 0.0
    %1387 = vmatprep.subr.mxu0 0.0
    %1388 = vmatpush1.msra.mxu0 0.0
    %1389 = vmatprep.subr.mxu0 0.0
    %1390 = vmatpush1.msra.mxu0 0.0
    %1391 = vmatprep.subr.mxu0 0.0
    %1392 = vmatpush1.msra.mxu0 0.0
    %1393 = vmatprep.subr.mxu0 0.0
    %1394 = vmatpush1.msra.mxu0 0.0
    %1395 = vmatprep.subr.mxu0 0.0
    %1396 = vmatpush1.msra.mxu0 0.0
    %1397 = vmatprep.subr.mxu0 0.0
    %1398 = vmatpush1.msra.mxu0 0.0
    %1399 = vmatprep.subr.mxu0 0.0
    %1400 = vmatpush1.msra.mxu0 0.0
    %1401 = vmatprep.subr.mxu0 0.0
    %1402 = vmatpush1.msra.mxu0 0.0
    %1403 = vmatprep.subr.mxu0 0.0
    %1404 = vmatpush1.msra.mxu0 0.0
    %1405 = vmatprep.subr.mxu0 0.0
    %1406 = vmatpush1.msra.mxu0 0.0
    %1407 = vmatprep.subr.mxu0 0.0
    %1408 = vmatpush1.msra.mxu0 0.0
    %1409 = vmatprep.subr.mxu0 0.0
    %1410 = vmatpush1.msra.mxu0 0.0
    %1411 = vmatprep.subr.mxu0 0.0
    %1412 = vmatpush1.msra.mxu0 0.0
    %1413 = vmatprep.subr.mxu0 0.0
    %1414 = vmatpush1.msra.mxu0 0.0
    %1415 = vmatprep.subr.mxu0 0.0
    %1416 = vmatpush1.msra.mxu0 0.0
    %1417 = vmatprep.subr.mxu0 0.0
    %1418 = vmatpush1.msra.mxu0 0.0
    %1419 = vmatprep.subr.mxu0 0.0
    %1420 = vmatpush1.msra.mxu0 0.0
    %1421 = vmatprep.subr.mxu0 0.0
    %1422 = vmatpush1.msra.mxu0 0.0
    %1423 = vmatprep.subr.mxu0 0.0
    %1424 = vmatpush1.msra.mxu0 0.0
    %1425 = vmatprep.subr.mxu0 0.0
    %1426 = vmatpush1.msra.mxu0 0.0
    %1427 = vmatprep.subr.mxu0 0.0
    %1428 = vmatpush1.msra.mxu0 0.0
    %1429 = vmatprep.subr.mxu0 0.0
    %1430 = vmatpush1.msra.mxu0 0.0
    %1431 = vmatprep.subr.mxu0 0.0
    %1432 = vmatpush1.msra.mxu0 0.0
    %1433 = vmatprep.mubr.f32.mxu0 0.0
    %1434 = vmatmul.mubr.f32.gmra.mrb[0].mxu0 %v1355
    %v1435 = vpop.f32.mrb[0].mxu0
    %v1436 = vadd.f32 0.0, %v1435
    %v1437 = vpop.f32.mrb[0].mxu0
    %v1438 = vadd.f32 0.0, %v1437
    %1439 = vdwg.mxu0
    %1440 = vmatprep.subr.mxu0 %v1363
    %1441 = vmatpush1.msra.mxu0 %v1361
    %1442 = vmatprep.subr.mxu0 0.0
    %1443 = vmatpush1.msra.mxu0 0.0
    %1444 = vmatprep.subr.mxu0 0.0
    %1445 = vmatpush1.msra.mxu0 0.0
    %1446 = vmatprep.subr.mxu0 0.0
    %1447 = vmatpush1.msra.mxu0 0.0
    %1448 = vmatprep.subr.mxu0 0.0
    %1449 = vmatpush1.msra.mxu0 0.0
    %1450 = vmatprep.subr.mxu0 0.0
    %1451 = vmatpush1.msra.mxu0 0.0
    %1452 = vmatprep.subr.mxu0 0.0
    %1453 = vmatpush1.msra.mxu0 0.0
    %1454 = vmatprep.subr.mxu0 0.0
    %1455 = vmatpush1.msra.mxu0 0.0
    %1456 = vmatprep.subr.mxu0 0.0
    %1457 = vmatpush1.msra.mxu0 0.0
    %1458 = vmatprep.subr.mxu0 0.0
    %1459 = vmatpush1.msra.mxu0 0.0
    %1460 = vmatprep.subr.mxu0 0.0
    %1461 = vmatpush1.msra.mxu0 0.0
    %1462 = vmatprep.subr.mxu0 0.0
    %1463 = vmatpush1.msra.mxu0 0.0
    %1464 = vmatprep.subr.mxu0 0.0
    %1465 = vmatpush1.msra.mxu0 0.0
    %1466 = vmatprep.subr.mxu0 0.0
    %1467 = vmatpush1.msra.mxu0 0.0
    %1468 = vmatprep.subr.mxu0 0.0
    %1469 = vmatpush1.msra.mxu0 0.0
    %1470 = vmatprep.subr.mxu0 0.0
    %1471 = vmatpush1.msra.mxu0 0.0
    %1472 = vmatprep.subr.mxu0 0.0
    %1473 = vmatpush1.msra.mxu0 0.0
    %1474 = vmatprep.subr.mxu0 0.0
    %1475 = vmatpush1.msra.mxu0 0.0
    %1476 = vmatprep.subr.mxu0 0.0
    %1477 = vmatpush1.msra.mxu0 0.0
    %1478 = vmatprep.subr.mxu0 0.0
    %1479 = vmatpush1.msra.mxu0 0.0
    %1480 = vmatprep.subr.mxu0 0.0
    %1481 = vmatpush1.msra.mxu0 0.0
    %1482 = vmatprep.subr.mxu0 0.0
    %1483 = vmatpush1.msra.mxu0 0.0
    %1484 = vmatprep.subr.mxu0 0.0
    %1485 = vmatpush1.msra.mxu0 0.0
    %1486 = vmatprep.subr.mxu0 0.0
    %1487 = vmatpush1.msra.mxu0 0.0
    %1488 = vmatprep.subr.mxu0 0.0
    %1489 = vmatpush1.msra.mxu0 0.0
    %1490 = vmatprep.subr.mxu0 0.0
    %1491 = vmatpush1.msra.mxu0 0.0
    %1492 = vmatprep.subr.mxu0 0.0
    %1493 = vmatpush1.msra.mxu0 0.0
    %1494 = vmatprep.subr.mxu0 0.0
    %1495 = vmatpush1.msra.mxu0 0.0
    %1496 = vmatprep.subr.mxu0 0.0
    %1497 = vmatpush1.msra.mxu0 0.0
    %1498 = vmatprep.subr.mxu0 0.0
    %1499 = vmatpush1.msra.mxu0 0.0
    %1500 = vmatprep.subr.mxu0 0.0
    %1501 = vmatpush1.msra.mxu0 0.0
    %1502 = vmatprep.subr.mxu0 0.0
    %1503 = vmatpush1.msra.mxu0 0.0
    %1504 = vmatprep.mubr.f32.mxu0 0.0
    %1505 = vmatmul.mubr.f32.gmra.mrb[0].mxu0 %v1355
    %v1506 = vpop.f32.mrb[0].mxu0
    %v1507 = vadd.f32 0.0, %v1506
    %v1508 = vpop.f32.mrb[0].mxu0
    %v1509 = vadd.f32 0.0, %v1508
    %1510 = vdwg.mxu0
    %1511 = vmatprep.subr.mxu0 %v1367
    %1512 = vmatpush1.msra.mxu0 %v1365
    %1513 = vmatprep.subr.mxu0 0.0
    %1514 = vmatpush1.msra.mxu0 0.0
    %1515 = vmatprep.subr.mxu0 0.0
    %1516 = vmatpush1.msra.mxu0 0.0
    %1517 = vmatprep.subr.mxu0 0.0
    %1518 = vmatpush1.msra.mxu0 0.0
    %1519 = vmatprep.subr.mxu0 0.0
    %1520 = vmatpush1.msra.mxu0 0.0
    %1521 = vmatprep.subr.mxu0 0.0
    %1522 = vmatpush1.msra.mxu0 0.0
    %1523 = vmatprep.subr.mxu0 0.0
    %1524 = vmatpush1.msra.mxu0 0.0
    %1525 = vmatprep.subr.mxu0 0.0
    %1526 = vmatpush1.msra.mxu0 0.0
    %1527 = vmatprep.subr.mxu0 0.0
    %1528 = vmatpush1.msra.mxu0 0.0
    %1529 = vmatprep.subr.mxu0 0.0
    %1530 = vmatpush1.msra.mxu0 0.0
    %1531 = vmatprep.subr.mxu0 0.0
    %1532 = vmatpush1.msra.mxu0 0.0
    %1533 = vmatprep.subr.mxu0 0.0
    %1534 = vmatpush1.msra.mxu0 0.0
    %1535 = vmatprep.subr.mxu0 0.0
    %1536 = vmatpush1.msra.mxu0 0.0
    %1537 = vmatprep.subr.mxu0 0.0
    %1538 = vmatpush1.msra.mxu0 0.0
    %1539 = vmatprep.subr.mxu0 0.0
    %1540 = vmatpush1.msra.mxu0 0.0
    %1541 = vmatprep.subr.mxu0 0.0
    %1542 = vmatpush1.msra.mxu0 0.0
    %1543 = vmatprep.subr.mxu0 0.0
    %1544 = vmatpush1.msra.mxu0 0.0
    %1545 = vmatprep.subr.mxu0 0.0
    %1546 = vmatpush1.msra.mxu0 0.0
    %1547 = vmatprep.subr.mxu0 0.0
    %1548 = vmatpush1.msra.mxu0 0.0
    %1549 = vmatprep.subr.mxu0 0.0
    %1550 = vmatpush1.msra.mxu0 0.0
    %1551 = vmatprep.subr.mxu0 0.0
    %1552 = vmatpush1.msra.mxu0 0.0
    %1553 = vmatprep.subr.mxu0 0.0
    %1554 = vmatpush1.msra.mxu0 0.0
    %1555 = vmatprep.subr.mxu0 0.0
    %1556 = vmatpush1.msra.mxu0 0.0
    %1557 = vmatprep.subr.mxu0 0.0
    %1558 = vmatpush1.msra.mxu0 0.0
    %1559 = vmatprep.subr.mxu0 0.0
    %1560 = vmatpush1.msra.mxu0 0.0
    %1561 = vmatprep.subr.mxu0 0.0
    %1562 = vmatpush1.msra.mxu0 0.0
    %1563 = vmatprep.subr.mxu0 0.0
    %1564 = vmatpush1.msra.mxu0 0.0
    %1565 = vmatprep.subr.mxu0 0.0
    %1566 = vmatpush1.msra.mxu0 0.0
    %1567 = vmatprep.subr.mxu0 0.0
    %1568 = vmatpush1.msra.mxu0 0.0
    %1569 = vmatprep.subr.mxu0 0.0
    %1570 = vmatpush1.msra.mxu0 0.0
    %1571 = vmatprep.subr.mxu0 0.0
    %1572 = vmatpush1.msra.mxu0 0.0
    %1573 = vmatprep.subr.mxu0 0.0
    %1574 = vmatpush1.msra.mxu0 0.0
    %1575 = vmatprep.mubr.f32.mxu0 0.0
    %1576 = vmatmul.mubr.f32.gmra.mrb[0].mxu0 %v1355
    %v1577 = vpop.f32.mrb[0].mxu0
    %v1578 = vadd.f32 0.0, %v1577
    %v1579 = vpop.f32.mrb[0].mxu0
    %v1580 = vadd.f32 0.0, %v1579
    %1581 = vdwg.mxu0
    %v1582 = vadd.f32 %v1315, %v1436
    %v1583 = vadd.f32 %v1316, %v1438
    %v1584 = vadd.f32 %v1317, %v1507
    %v1585 = vadd.f32 %v1318, %v1509
    %v1586 = vadd.f32 %v1319, %v1578
    %v1587 = vadd.f32 %v1320, %v1580
    %v1588 = vld [vmem:[#allocation2 + $0x4] sm:$0xff]
    %v1589 = vld [vmem:[#allocation2 + $0xc] sm:$0xff]
    %v1590 = vld [vmem:[#allocation2 + $0x14] sm:$0xff]
    %v1591 = vld [vmem:[#allocation2 + $0x1c] sm:$0xf]
    %1592 = vrot.lane.b32.xlu0 %v30, 104
    %v1593 = vpop.permute.xlu0 %1592
    %v1598 = vcombine.high %v1588, %v1588
    %v1599 = vcombine.high %v1589, %v1589
    %v1600 = vcombine.high %v1590, %v1590
    %1601 = vrot.lane.b32.xlu0 %v1588, 111
    %v1602 = vpop.permute.xlu0 %1601
    %1603 = vrot.lane.b32.xlu0 %v1598, 111
    %v1604 = vpop.permute.xlu0 %1603
    %1605 = vrot.lane.b32.xlu0 %v1589, 111
    %v1606 = vpop.permute.xlu0 %1605
    %1607 = vrot.lane.b32.xlu0 %v1599, 111
    %v1608 = vpop.permute.xlu0 %1607
    %1609 = vrot.lane.b32.xlu0 %v1590, 111
    %v1610 = vpop.permute.xlu0 %1609
    %1611 = vrot.lane.b32.xlu0 %v1600, 111
    %v1612 = vpop.permute.xlu0 %1611
    %1613 = vrot.lane.b32.xlu0 %v1591, 111
    %v1614 = vpop.permute.xlu0 %1613
    %vm1615 = vcmask 908288
    %v1616 = vsel %vm1615, %v1602, %v1604
    %v1617 = vsel %vm1615, %v1604, %v1606
    %v1618 = vsel %vm1615, %v1606, %v1608
    %v1619 = vsel %vm1615, %v1608, %v1610
    %v1620 = vsel %vm1615, %v1610, %v1612
    %v1621 = vsel %vm1615, %v1612, %v1614
    %v1622 = vsel %vm66, %v1593, 0
    %v1624 = vsel %vm69, %v1616, 0
    %v1626 = vsel %vm69, %v1617, 0
    %v1628 = vsel %vm69, %v1618, 0
    %v1630 = vsel %vm69, %v1619, 0
    %v1632 = vsel %vm69, %v1620, 0
    %v1634 = vsel %vm69, %v1621, 0
    %1636 = vmatprep.subr.mxu0 %v1626
    %1637 = vmatpush1.msra.mxu0 %v1624
    %1638 = vmatprep.subr.mxu0 0.0
    %1639 = vmatpush1.msra.mxu0 0.0
    %1640 = vmatprep.subr.mxu0 0.0
    %1641 = vmatpush1.msra.mxu0 0.0
    %1642 = vmatprep.subr.mxu0 0.0
    %1643 = vmatpush1.msra.mxu0 0.0
    %1644 = vmatprep.subr.mxu0 0.0
    %1645 = vmatpush1.msra.mxu0 0.0
    %1646 = vmatprep.subr.mxu0 0.0
    %1647 = vmatpush1.msra.mxu0 0.0
    %1648 = vmatprep.subr.mxu0 0.0
    %1649 = vmatpush1.msra.mxu0 0.0
    %1650 = vmatprep.subr.mxu0 0.0
    %1651 = vmatpush1.msra.mxu0 0.0
    %1652 = vmatprep.subr.mxu0 0.0
    %1653 = vmatpush1.msra.mxu0 0.0
    %1654 = vmatprep.subr.mxu0 0.0
    %1655 = vmatpush1.msra.mxu0 0.0
    %1656 = vmatprep.subr.mxu0 0.0
    %1657 = vmatpush1.msra.mxu0 0.0
    %1658 = vmatprep.subr.mxu0 0.0
    %1659 = vmatpush1.msra.mxu0 0.0
    %1660 = vmatprep.subr.mxu0 0.0
    %1661 = vmatpush1.msra.mxu0 0.0
    %1662 = vmatprep.subr.mxu0 0.0
    %1663 = vmatpush1.msra.mxu0 0.0
    %1664 = vmatprep.subr.mxu0 0.0
    %1665 = vmatpush1.msra.mxu0 0.0
    %1666 = vmatprep.subr.mxu0 0.0
    %1667 = vmatpush1.msra.mxu0 0.0
    %1668 = vmatprep.subr.mxu0 0.0
    %1669 = vmatpush1.msra.mxu0 0.0
    %1670 = vmatprep.subr.mxu0 0.0
    %1671 = vmatpush1.msra.mxu0 0.0
    %1672 = vmatprep.subr.mxu0 0.0
    %1673 = vmatpush1.msra.mxu0 0.0
    %1674 = vmatprep.subr.mxu0 0.0
    %1675 = vmatpush1.msra.mxu0 0.0
    %1676 = vmatprep.subr.mxu0 0.0
    %1677 = vmatpush1.msra.mxu0 0.0
    %1678 = vmatprep.subr.mxu0 0.0
    %1679 = vmatpush1.msra.mxu0 0.0
    %1680 = vmatprep.subr.mxu0 0.0
    %1681 = vmatpush1.msra.mxu0 0.0
    %1682 = vmatprep.subr.mxu0 0.0
    %1683 = vmatpush1.msra.mxu0 0.0
    %1684 = vmatprep.subr.mxu0 0.0
    %1685 = vmatpush1.msra.mxu0 0.0
    %1686 = vmatprep.subr.mxu0 0.0
    %1687 = vmatpush1.msra.mxu0 0.0
    %1688 = vmatprep.subr.mxu0 0.0
    %1689 = vmatpush1.msra.mxu0 0.0
    %1690 = vmatprep.subr.mxu0 0.0
    %1691 = vmatpush1.msra.mxu0 0.0
    %1692 = vmatprep.subr.mxu0 0.0
    %1693 = vmatpush1.msra.mxu0 0.0
    %1694 = vmatprep.subr.mxu0 0.0
    %1695 = vmatpush1.msra.mxu0 0.0
    %1696 = vmatprep.subr.mxu0 0.0
    %1697 = vmatpush1.msra.mxu0 0.0
    %1698 = vmatprep.subr.mxu0 0.0
    %1699 = vmatpush1.msra.mxu0 0.0
    %1700 = vmatprep.mubr.f32.mxu0 0.0
    %1701 = vmatmul.mubr.f32.gmra.mrb[0].mxu0 %v1622
    %v1702 = vpop.f32.mrb[0].mxu0
    %v1703 = vadd.f32 0.0, %v1702
    %v1704 = vpop.f32.mrb[0].mxu0
    %v1705 = vadd.f32 0.0, %v1704
    %1706 = vdwg.mxu0
    %1707 = vmatprep.subr.mxu0 %v1630
    %1708 = vmatpush1.msra.mxu0 %v1628
    %1709 = vmatprep.subr.mxu0 0.0
    %1710 = vmatpush1.msra.mxu0 0.0
    %1711 = vmatprep.subr.mxu0 0.0
    %1712 = vmatpush1.msra.mxu0 0.0
    %1713 = vmatprep.subr.mxu0 0.0
    %1714 = vmatpush1.msra.mxu0 0.0
    %1715 = vmatprep.subr.mxu0 0.0
    %1716 = vmatpush1.msra.mxu0 0.0
    %1717 = vmatprep.subr.mxu0 0.0
    %1718 = vmatpush1.msra.mxu0 0.0
    %1719 = vmatprep.subr.mxu0 0.0
    %1720 = vmatpush1.msra.mxu0 0.0
    %1721 = vmatprep.subr.mxu0 0.0
    %1722 = vmatpush1.msra.mxu0 0.0
    %1723 = vmatprep.subr.mxu0 0.0
    %1724 = vmatpush1.msra.mxu0 0.0
    %1725 = vmatprep.subr.mxu0 0.0
    %1726 = vmatpush1.msra.mxu0 0.0
    %1727 = vmatprep.subr.mxu0 0.0
    %1728 = vmatpush1.msra.mxu0 0.0
    %1729 = vmatprep.subr.mxu0 0.0
    %1730 = vmatpush1.msra.mxu0 0.0
    %1731 = vmatprep.subr.mxu0 0.0
    %1732 = vmatpush1.msra.mxu0 0.0
    %1733 = vmatprep.subr.mxu0 0.0
    %1734 = vmatpush1.msra.mxu0 0.0
    %1735 = vmatprep.subr.mxu0 0.0
    %1736 = vmatpush1.msra.mxu0 0.0
    %1737 = vmatprep.subr.mxu0 0.0
    %1738 = vmatpush1.msra.mxu0 0.0
    %1739 = vmatprep.subr.mxu0 0.0
    %1740 = vmatpush1.msra.mxu0 0.0
    %1741 = vmatprep.subr.mxu0 0.0
    %1742 = vmatpush1.msra.mxu0 0.0
    %1743 = vmatprep.subr.mxu0 0.0
    %1744 = vmatpush1.msra.mxu0 0.0
    %1745 = vmatprep.subr.mxu0 0.0
    %1746 = vmatpush1.msra.mxu0 0.0
    %1747 = vmatprep.subr.mxu0 0.0
    %1748 = vmatpush1.msra.mxu0 0.0
    %1749 = vmatprep.subr.mxu0 0.0
    %1750 = vmatpush1.msra.mxu0 0.0
    %1751 = vmatprep.subr.mxu0 0.0
    %1752 = vmatpush1.msra.mxu0 0.0
    %1753 = vmatprep.subr.mxu0 0.0
    %1754 = vmatpush1.msra.mxu0 0.0
    %1755 = vmatprep.subr.mxu0 0.0
    %1756 = vmatpush1.msra.mxu0 0.0
    %1757 = vmatprep.subr.mxu0 0.0
    %1758 = vmatpush1.msra.mxu0 0.0
    %1759 = vmatprep.subr.mxu0 0.0
    %1760 = vmatpush1.msra.mxu0 0.0
    %1761 = vmatprep.subr.mxu0 0.0
    %1762 = vmatpush1.msra.mxu0 0.0
    %1763 = vmatprep.subr.mxu0 0.0
    %1764 = vmatpush1.msra.mxu0 0.0
    %1765 = vmatprep.subr.mxu0 0.0
    %1766 = vmatpush1.msra.mxu0 0.0
    %1767 = vmatprep.subr.mxu0 0.0
    %1768 = vmatpush1.msra.mxu0 0.0
    %1769 = vmatprep.subr.mxu0 0.0
    %1770 = vmatpush1.msra.mxu0 0.0
    %1771 = vmatprep.mubr.f32.mxu0 0.0
    %1772 = vmatmul.mubr.f32.gmra.mrb[0].mxu0 %v1622
    %v1773 = vpop.f32.mrb[0].mxu0
    %v1774 = vadd.f32 0.0, %v1773
    %v1775 = vpop.f32.mrb[0].mxu0
    %v1776 = vadd.f32 0.0, %v1775
    %1777 = vdwg.mxu0
    %1778 = vmatprep.subr.mxu0 %v1634
    %1779 = vmatpush1.msra.mxu0 %v1632
    %1780 = vmatprep.subr.mxu0 0.0
    %1781 = vmatpush1.msra.mxu0 0.0
    %1782 = vmatprep.subr.mxu0 0.0
    %1783 = vmatpush1.msra.mxu0 0.0
    %1784 = vmatprep.subr.mxu0 0.0
    %1785 = vmatpush1.msra.mxu0 0.0
    %1786 = vmatprep.subr.mxu0 0.0
    %1787 = vmatpush1.msra.mxu0 0.0
    %1788 = vmatprep.subr.mxu0 0.0
    %1789 = vmatpush1.msra.mxu0 0.0
    %1790 = vmatprep.subr.mxu0 0.0
    %1791 = vmatpush1.msra.mxu0 0.0
    %1792 = vmatprep.subr.mxu0 0.0
    %1793 = vmatpush1.msra.mxu0 0.0
    %1794 = vmatprep.subr.mxu0 0.0
    %1795 = vmatpush1.msra.mxu0 0.0
    %1796 = vmatprep.subr.mxu0 0.0
    %1797 = vmatpush1.msra.mxu0 0.0
    %1798 = vmatprep.subr.mxu0 0.0
    %1799 = vmatpush1.msra.mxu0 0.0
    %1800 = vmatprep.subr.mxu0 0.0
    %1801 = vmatpush1.msra.mxu0 0.0
    %1802 = vmatprep.subr.mxu0 0.0
    %1803 = vmatpush1.msra.mxu0 0.0
    %1804 = vmatprep.subr.mxu0 0.0
    %1805 = vmatpush1.msra.mxu0 0.0
    %1806 = vmatprep.subr.mxu0 0.0
    %1807 = vmatpush1.msra.mxu0 0.0
    %1808 = vmatprep.subr.mxu0 0.0
    %1809 = vmatpush1.msra.mxu0 0.0
    %1810 = vmatprep.subr.mxu0 0.0
    %1811 = vmatpush1.msra.mxu0 0.0
    %1812 = vmatprep.subr.mxu0 0.0
    %1813 = vmatpush1.msra.mxu0 0.0
    %1814 = vmatprep.subr.mxu0 0.0
    %1815 = vmatpush1.msra.mxu0 0.0
    %1816 = vmatprep.subr.mxu0 0.0
    %1817 = vmatpush1.msra.mxu0 0.0
    %1818 = vmatprep.subr.mxu0 0.0
    %1819 = vmatpush1.msra.mxu0 0.0
    %1820 = vmatprep.subr.mxu0 0.0
    %1821 = vmatpush1.msra.mxu0 0.0
    %1822 = vmatprep.subr.mxu0 0.0
    %1823 = vmatpush1.msra.mxu0 0.0
    %1824 = vmatprep.subr.mxu0 0.0
    %1825 = vmatpush1.msra.mxu0 0.0
    %1826 = vmatprep.subr.mxu0 0.0
    %1827 = vmatpush1.msra.mxu0 0.0
    %1828 = vmatprep.subr.mxu0 0.0
    %1829 = vmatpush1.msra.mxu0 0.0
    %1830 = vmatprep.subr.mxu0 0.0
    %1831 = vmatpush1.msra.mxu0 0.0
    %1832 = vmatprep.subr.mxu0 0.0
    %1833 = vmatpush1.msra.mxu0 0.0
    %1834 = vmatprep.subr.mxu0 0.0
    %1835 = vmatpush1.msra.mxu0 0.0
    %1836 = vmatprep.subr.mxu0 0.0
    %1837 = vmatpush1.msra.mxu0 0.0
    %1838 = vmatprep.subr.mxu0 0.0
    %1839 = vmatpush1.msra.mxu0 0.0
    %1840 = vmatprep.subr.mxu0 0.0
    %1841 = vmatpush1.msra.mxu0 0.0
    %1842 = vmatprep.mubr.f32.mxu0 0.0
    %1843 = vmatmul.mubr.f32.gmra.mrb[0].mxu0 %v1622
    %v1844 = vpop.f32.mrb[0].mxu0
    %v1845 = vadd.f32 0.0, %v1844
    %v1846 = vpop.f32.mrb[0].mxu0
    %v1847 = vadd.f32 0.0, %v1846
    %1848 = vdwg.mxu0
    %v1849 = vadd.f32 %v1582, %v1703
    %v1850 = vadd.f32 %v1583, %v1705
    %v1851 = vadd.f32 %v1584, %v1774
    %v1852 = vadd.f32 %v1585, %v1776
    %v1853 = vadd.f32 %v1586, %v1845
    %v1854 = vadd.f32 %v1587, %v1847
    %v1855 = vld [vmem:[#allocation2 + $0x4] sm:$0xff]
    %v1856 = vld [vmem:[#allocation2 + $0xc] sm:$0xff]
    %v1857 = vld [vmem:[#allocation2 + $0x14] sm:$0xff]
    %v1858 = vld [vmem:[#allocation2 + $0x1c] sm:$0xf]
    %1859 = vrot.lane.b32.xlu0 %v30, 100
    %v1860 = vpop.permute.xlu0 %1859
    %v1865 = vcombine.high %v1855, %v1855
    %v1866 = vcombine.high %v1856, %v1856
    %v1867 = vcombine.high %v1857, %v1857
    %1868 = vrot.lane.b32.xlu0 %v1855, 110
    %v1869 = vpop.permute.xlu0 %1868
    %1870 = vrot.lane.b32.xlu0 %v1865, 110
    %v1871 = vpop.permute.xlu0 %1870
    %1872 = vrot.lane.b32.xlu0 %v1856, 110
    %v1873 = vpop.permute.xlu0 %1872
    %1874 = vrot.lane.b32.xlu0 %v1866, 110
    %v1875 = vpop.permute.xlu0 %1874
    %1876 = vrot.lane.b32.xlu0 %v1857, 110
    %v1877 = vpop.permute.xlu0 %1876
    %1878 = vrot.lane.b32.xlu0 %v1867, 110
    %v1879 = vpop.permute.xlu0 %1878
    %1880 = vrot.lane.b32.xlu0 %v1858, 110
    %v1881 = vpop.permute.xlu0 %1880
    %vm1882 = vcmask 900096
    %v1883 = vsel %vm1882, %v1869, %v1871
    %v1884 = vsel %vm1882, %v1871, %v1873
    %v1885 = vsel %vm1882, %v1873, %v1875
    %v1886 = vsel %vm1882, %v1875, %v1877
    %v1887 = vsel %vm1882, %v1877, %v1879
    %v1888 = vsel %vm1882, %v1879, %v1881
    %v1889 = vsel %vm66, %v1860, 0
    %v1891 = vsel %vm69, %v1883, 0
    %v1893 = vsel %vm69, %v1884, 0
    %v1895 = vsel %vm69, %v1885, 0
    %v1897 = vsel %vm69, %v1886, 0
    %v1899 = vsel %vm69, %v1887, 0
    %v1901 = vsel %vm69, %v1888, 0
    %1903 = vmatprep.subr.mxu0 %v1893
    %1904 = vmatpush1.msra.mxu0 %v1891
    %1905 = vmatprep.subr.mxu0 0.0
    %1906 = vmatpush1.msra.mxu0 0.0
    %1907 = vmatprep.subr.mxu0 0.0
    %1908 = vmatpush1.msra.mxu0 0.0
    %1909 = vmatprep.subr.mxu0 0.0
    %1910 = vmatpush1.msra.mxu0 0.0
    %1911 = vmatprep.subr.mxu0 0.0
    %1912 = vmatpush1.msra.mxu0 0.0
    %1913 = vmatprep.subr.mxu0 0.0
    %1914 = vmatpush1.msra.mxu0 0.0
    %1915 = vmatprep.subr.mxu0 0.0
    %1916 = vmatpush1.msra.mxu0 0.0
    %1917 = vmatprep.subr.mxu0 0.0
    %1918 = vmatpush1.msra.mxu0 0.0
    %1919 = vmatprep.subr.mxu0 0.0
    %1920 = vmatpush1.msra.mxu0 0.0
    %1921 = vmatprep.subr.mxu0 0.0
    %1922 = vmatpush1.msra.mxu0 0.0
    %1923 = vmatprep.subr.mxu0 0.0
    %1924 = vmatpush1.msra.mxu0 0.0
    %1925 = vmatprep.subr.mxu0 0.0
    %1926 = vmatpush1.msra.mxu0 0.0
    %1927 = vmatprep.subr.mxu0 0.0
    %1928 = vmatpush1.msra.mxu0 0.0
    %1929 = vmatprep.subr.mxu0 0.0
    %1930 = vmatpush1.msra.mxu0 0.0
    %1931 = vmatprep.subr.mxu0 0.0
    %1932 = vmatpush1.msra.mxu0 0.0
    %1933 = vmatprep.subr.mxu0 0.0
    %1934 = vmatpush1.msra.mxu0 0.0
    %1935 = vmatprep.subr.mxu0 0.0
    %1936 = vmatpush1.msra.mxu0 0.0
    %1937 = vmatprep.subr.mxu0 0.0
    %1938 = vmatpush1.msra.mxu0 0.0
    %1939 = vmatprep.subr.mxu0 0.0
    %1940 = vmatpush1.msra.mxu0 0.0
    %1941 = vmatprep.subr.mxu0 0.0
    %1942 = vmatpush1.msra.mxu0 0.0
    %1943 = vmatprep.subr.mxu0 0.0
    %1944 = vmatpush1.msra.mxu0 0.0
    %1945 = vmatprep.subr.mxu0 0.0
    %1946 = vmatpush1.msra.mxu0 0.0
    %1947 = vmatprep.subr.mxu0 0.0
    %1948 = vmatpush1.msra.mxu0 0.0
    %1949 = vmatprep.subr.mxu0 0.0
    %1950 = vmatpush1.msra.mxu0 0.0
    %1951 = vmatprep.subr.mxu0 0.0
    %1952 = vmatpush1.msra.mxu0 0.0
    %1953 = vmatprep.subr.mxu0 0.0
    %1954 = vmatpush1.msra.mxu0 0.0
    %1955 = vmatprep.subr.mxu0 0.0
    %1956 = vmatpush1.msra.mxu0 0.0
    %1957 = vmatprep.subr.mxu0 0.0
    %1958 = vmatpush1.msra.mxu0 0.0
    %1959 = vmatprep.subr.mxu0 0.0
    %1960 = vmatpush1.msra.mxu0 0.0
    %1961 = vmatprep.subr.mxu0 0.0
    %1962 = vmatpush1.msra.mxu0 0.0
    %1963 = vmatprep.subr.mxu0 0.0
    %1964 = vmatpush1.msra.mxu0 0.0
    %1965 = vmatprep.subr.mxu0 0.0
    %1966 = vmatpush1.msra.mxu0 0.0
    %1967 = vmatprep.mubr.f32.mxu0 0.0
    %1968 = vmatmul.mubr.f32.gmra.mrb[0].mxu0 %v1889
    %v1969 = vpop.f32.mrb[0].mxu0
    %v1970 = vadd.f32 0.0, %v1969
    %v1971 = vpop.f32.mrb[0].mxu0
    %v1972 = vadd.f32 0.0, %v1971
    %1973 = vdwg.mxu0
    %1974 = vmatprep.subr.mxu0 %v1897
    %1975 = vmatpush1.msra.mxu0 %v1895
    %1976 = vmatprep.subr.mxu0 0.0
    %1977 = vmatpush1.msra.mxu0 0.0
    %1978 = vmatprep.subr.mxu0 0.0
    %1979 = vmatpush1.msra.mxu0 0.0
    %1980 = vmatprep.subr.mxu0 0.0
    %1981 = vmatpush1.msra.mxu0 0.0
    %1982 = vmatprep.subr.mxu0 0.0
    %1983 = vmatpush1.msra.mxu0 0.0
    %1984 = vmatprep.subr.mxu0 0.0
    %1985 = vmatpush1.msra.mxu0 0.0
    %1986 = vmatprep.subr.mxu0 0.0
    %1987 = vmatpush1.msra.mxu0 0.0
    %1988 = vmatprep.subr.mxu0 0.0
    %1989 = vmatpush1.msra.mxu0 0.0
    %1990 = vmatprep.subr.mxu0 0.0
    %1991 = vmatpush1.msra.mxu0 0.0
    %1992 = vmatprep.subr.mxu0 0.0
    %1993 = vmatpush1.msra.mxu0 0.0
    %1994 = vmatprep.subr.mxu0 0.0
    %1995 = vmatpush1.msra.mxu0 0.0
    %1996 = vmatprep.subr.mxu0 0.0
    %1997 = vmatpush1.msra.mxu0 0.0
    %1998 = vmatprep.subr.mxu0 0.0
    %1999 = vmatpush1.msra.mxu0 0.0
    %2000 = vmatprep.subr.mxu0 0.0
    %2001 = vmatpush1.msra.mxu0 0.0
    %2002 = vmatprep.subr.mxu0 0.0
    %2003 = vmatpush1.msra.mxu0 0.0
    %2004 = vmatprep.subr.mxu0 0.0
    %2005 = vmatpush1.msra.mxu0 0.0
    %2006 = vmatprep.subr.mxu0 0.0
    %2007 = vmatpush1.msra.mxu0 0.0
    %2008 = vmatprep.subr.mxu0 0.0
    %2009 = vmatpush1.msra.mxu0 0.0
    %2010 = vmatprep.subr.mxu0 0.0
    %2011 = vmatpush1.msra.mxu0 0.0
    %2012 = vmatprep.subr.mxu0 0.0
    %2013 = vmatpush1.msra.mxu0 0.0
    %2014 = vmatprep.subr.mxu0 0.0
    %2015 = vmatpush1.msra.mxu0 0.0
    %2016 = vmatprep.subr.mxu0 0.0
    %2017 = vmatpush1.msra.mxu0 0.0
    %2018 = vmatprep.subr.mxu0 0.0
    %2019 = vmatpush1.msra.mxu0 0.0
    %2020 = vmatprep.subr.mxu0 0.0
    %2021 = vmatpush1.msra.mxu0 0.0
    %2022 = vmatprep.subr.mxu0 0.0
    %2023 = vmatpush1.msra.mxu0 0.0
    %2024 = vmatprep.subr.mxu0 0.0
    %2025 = vmatpush1.msra.mxu0 0.0
    %2026 = vmatprep.subr.mxu0 0.0
    %2027 = vmatpush1.msra.mxu0 0.0
    %2028 = vmatprep.subr.mxu0 0.0
    %2029 = vmatpush1.msra.mxu0 0.0
    %2030 = vmatprep.subr.mxu0 0.0
    %2031 = vmatpush1.msra.mxu0 0.0
    %2032 = vmatprep.subr.mxu0 0.0
    %2033 = vmatpush1.msra.mxu0 0.0
    %2034 = vmatprep.subr.mxu0 0.0
    %2035 = vmatpush1.msra.mxu0 0.0
    %2036 = vmatprep.subr.mxu0 0.0
    %2037 = vmatpush1.msra.mxu0 0.0
    %2038 = vmatprep.mubr.f32.mxu0 0.0
    %2039 = vmatmul.mubr.f32.gmra.mrb[0].mxu0 %v1889
    %v2040 = vpop.f32.mrb[0].mxu0
    %v2041 = vadd.f32 0.0, %v2040
    %v2042 = vpop.f32.mrb[0].mxu0
    %v2043 = vadd.f32 0.0, %v2042
    %2044 = vdwg.mxu0
    %2045 = vmatprep.subr.mxu0 %v1901
    %2046 = vmatpush1.msra.mxu0 %v1899
    %2047 = vmatprep.subr.mxu0 0.0
    %2048 = vmatpush1.msra.mxu0 0.0
    %2049 = vmatprep.subr.mxu0 0.0
    %2050 = vmatpush1.msra.mxu0 0.0
    %2051 = vmatprep.subr.mxu0 0.0
    %2052 = vmatpush1.msra.mxu0 0.0
    %2053 = vmatprep.subr.mxu0 0.0
    %2054 = vmatpush1.msra.mxu0 0.0
    %2055 = vmatprep.subr.mxu0 0.0
    %2056 = vmatpush1.msra.mxu0 0.0
    %2057 = vmatprep.subr.mxu0 0.0
    %2058 = vmatpush1.msra.mxu0 0.0
    %2059 = vmatprep.subr.mxu0 0.0
    %2060 = vmatpush1.msra.mxu0 0.0
    %2061 = vmatprep.subr.mxu0 0.0
    %2062 = vmatpush1.msra.mxu0 0.0
    %2063 = vmatprep.subr.mxu0 0.0
    %2064 = vmatpush1.msra.mxu0 0.0
    %2065 = vmatprep.subr.mxu0 0.0
    %2066 = vmatpush1.msra.mxu0 0.0
    %2067 = vmatprep.subr.mxu0 0.0
    %2068 = vmatpush1.msra.mxu0 0.0
    %2069 = vmatprep.subr.mxu0 0.0
    %2070 = vmatpush1.msra.mxu0 0.0
    %2071 = vmatprep.subr.mxu0 0.0
    %2072 = vmatpush1.msra.mxu0 0.0
    %2073 = vmatprep.subr.mxu0 0.0
    %2074 = vmatpush1.msra.mxu0 0.0
    %2075 = vmatprep.subr.mxu0 0.0
    %2076 = vmatpush1.msra.mxu0 0.0
    %2077 = vmatprep.subr.mxu0 0.0
    %2078 = vmatpush1.msra.mxu0 0.0
    %2079 = vmatprep.subr.mxu0 0.0
    %2080 = vmatpush1.msra.mxu0 0.0
    %2081 = vmatprep.subr.mxu0 0.0
    %2082 = vmatpush1.msra.mxu0 0.0
    %2083 = vmatprep.subr.mxu0 0.0
    %2084 = vmatpush1.msra.mxu0 0.0
    %2085 = vmatprep.subr.mxu0 0.0
    %2086 = vmatpush1.msra.mxu0 0.0
    %2087 = vmatprep.subr.mxu0 0.0
    %2088 = vmatpush1.msra.mxu0 0.0
    %2089 = vmatprep.subr.mxu0 0.0
    %2090 = vmatpush1.msra.mxu0 0.0
    %2091 = vmatprep.subr.mxu0 0.0
    %2092 = vmatpush1.msra.mxu0 0.0
    %2093 = vmatprep.subr.mxu0 0.0
    %2094 = vmatpush1.msra.mxu0 0.0
    %2095 = vmatprep.subr.mxu0 0.0
    %2096 = vmatpush1.msra.mxu0 0.0
    %2097 = vmatprep.subr.mxu0 0.0
    %2098 = vmatpush1.msra.mxu0 0.0
    %2099 = vmatprep.subr.mxu0 0.0
    %2100 = vmatpush1.msra.mxu0 0.0
    %2101 = vmatprep.subr.mxu0 0.0
    %2102 = vmatpush1.msra.mxu0 0.0
    %2103 = vmatprep.subr.mxu0 0.0
    %2104 = vmatpush1.msra.mxu0 0.0
    %2105 = vmatprep.subr.mxu0 0.0
    %2106 = vmatpush1.msra.mxu0 0.0
    %2107 = vmatprep.subr.mxu0 0.0
    %2108 = vmatpush1.msra.mxu0 0.0
    %2109 = vmatprep.mubr.f32.mxu0 0.0
    %2110 = vmatmul.mubr.f32.gmra.mrb[0].mxu0 %v1889
    %v2111 = vpop.f32.mrb[0].mxu0
    %v2112 = vadd.f32 0.0, %v2111
    %v2113 = vpop.f32.mrb[0].mxu0
    %v2114 = vadd.f32 0.0, %v2113
    %2115 = vdwg.mxu0
    %v2116 = vadd.f32 %v1849, %v1970
    %v2117 = vadd.f32 %v1850, %v1972
    %v2118 = vadd.f32 %v1851, %v2041
    %v2119 = vadd.f32 %v1852, %v2043
    %v2120 = vadd.f32 %v1853, %v2112
    %v2121 = vadd.f32 %v1854, %v2114
    %v2122 = vld [vmem:[#allocation2 + $0x4] sm:$0xff]
    %v2123 = vld [vmem:[#allocation2 + $0xc] sm:$0xff]
    %v2124 = vld [vmem:[#allocation2 + $0x14] sm:$0xff]
    %v2125 = vld [vmem:[#allocation2 + $0x1c] sm:$0xf]
    %2126 = vrot.lane.b32.xlu0 %v30, 96
    %v2127 = vpop.permute.xlu0 %2126
    %v2132 = vcombine.high %v2122, %v2122
    %v2133 = vcombine.high %v2123, %v2123
    %v2134 = vcombine.high %v2124, %v2124
    %2135 = vrot.lane.b32.xlu0 %v2122, 109
    %v2136 = vpop.permute.xlu0 %2135
    %2137 = vrot.lane.b32.xlu0 %v2132, 109
    %v2138 = vpop.permute.xlu0 %2137
    %2139 = vrot.lane.b32.xlu0 %v2123, 109
    %v2140 = vpop.permute.xlu0 %2139
    %2141 = vrot.lane.b32.xlu0 %v2133, 109
    %v2142 = vpop.permute.xlu0 %2141
    %2143 = vrot.lane.b32.xlu0 %v2124, 109
    %v2144 = vpop.permute.xlu0 %2143
    %2145 = vrot.lane.b32.xlu0 %v2134, 109
    %v2146 = vpop.permute.xlu0 %2145
    %2147 = vrot.lane.b32.xlu0 %v2125, 109
    %v2148 = vpop.permute.xlu0 %2147
    %vm2149 = vcmask 891904
    %v2150 = vsel %vm2149, %v2136, %v2138
    %v2151 = vsel %vm2149, %v2138, %v2140
    %v2152 = vsel %vm2149, %v2140, %v2142
    %v2153 = vsel %vm2149, %v2142, %v2144
    %v2154 = vsel %vm2149, %v2144, %v2146
    %v2155 = vsel %vm2149, %v2146, %v2148
    %v2156 = vsel %vm66, %v2127, 0
    %v2158 = vsel %vm69, %v2150, 0
    %v2160 = vsel %vm69, %v2151, 0
    %v2162 = vsel %vm69, %v2152, 0
    %v2164 = vsel %vm69, %v2153, 0
    %v2166 = vsel %vm69, %v2154, 0
    %v2168 = vsel %vm69, %v2155, 0
    %2170 = vmatprep.subr.mxu0 %v2160
    %2171 = vmatpush1.msra.mxu0 %v2158
    %2172 = vmatprep.subr.mxu0 0.0
    %2173 = vmatpush1.msra.mxu0 0.0
    %2174 = vmatprep.subr.mxu0 0.0
    %2175 = vmatpush1.msra.mxu0 0.0
    %2176 = vmatprep.subr.mxu0 0.0
    %2177 = vmatpush1.msra.mxu0 0.0
    %2178 = vmatprep.subr.mxu0 0.0
    %2179 = vmatpush1.msra.mxu0 0.0
    %2180 = vmatprep.subr.mxu0 0.0
    %2181 = vmatpush1.msra.mxu0 0.0
    %2182 = vmatprep.subr.mxu0 0.0
    %2183 = vmatpush1.msra.mxu0 0.0
    %2184 = vmatprep.subr.mxu0 0.0
    %2185 = vmatpush1.msra.mxu0 0.0
    %2186 = vmatprep.subr.mxu0 0.0
    %2187 = vmatpush1.msra.mxu0 0.0
    %2188 = vmatprep.subr.mxu0 0.0
    %2189 = vmatpush1.msra.mxu0 0.0
    %2190 = vmatprep.subr.mxu0 0.0
    %2191 = vmatpush1.msra.mxu0 0.0
    %2192 = vmatprep.subr.mxu0 0.0
    %2193 = vmatpush1.msra.mxu0 0.0
    %2194 = vmatprep.subr.mxu0 0.0
    %2195 = vmatpush1.msra.mxu0 0.0
    %2196 = vmatprep.subr.mxu0 0.0
    %2197 = vmatpush1.msra.mxu0 0.0
    %2198 = vmatprep.subr.mxu0 0.0
    %2199 = vmatpush1.msra.mxu0 0.0
    %2200 = vmatprep.subr.mxu0 0.0
    %2201 = vmatpush1.msra.mxu0 0.0
    %2202 = vmatprep.subr.mxu0 0.0
    %2203 = vmatpush1.msra.mxu0 0.0
    %2204 = vmatprep.subr.mxu0 0.0
    %2205 = vmatpush1.msra.mxu0 0.0
    %2206 = vmatprep.subr.mxu0 0.0
    %2207 = vmatpush1.msra.mxu0 0.0
    %2208 = vmatprep.subr.mxu0 0.0
    %2209 = vmatpush1.msra.mxu0 0.0
    %2210 = vmatprep.subr.mxu0 0.0
    %2211 = vmatpush1.msra.mxu0 0.0
    %2212 = vmatprep.subr.mxu0 0.0
    %2213 = vmatpush1.msra.mxu0 0.0
    %2214 = vmatprep.subr.mxu0 0.0
    %2215 = vmatpush1.msra.mxu0 0.0
    %2216 = vmatprep.subr.mxu0 0.0
    %2217 = vmatpush1.msra.mxu0 0.0
    %2218 = vmatprep.subr.mxu0 0.0
    %2219 = vmatpush1.msra.mxu0 0.0
    %2220 = vmatprep.subr.mxu0 0.0
    %2221 = vmatpush1.msra.mxu0 0.0
    %2222 = vmatprep.subr.mxu0 0.0
    %2223 = vmatpush1.msra.mxu0 0.0
    %2224 = vmatprep.subr.mxu0 0.0
    %2225 = vmatpush1.msra.mxu0 0.0
    %2226 = vmatprep.subr.mxu0 0.0
    %2227 = vmatpush1.msra.mxu0 0.0
    %2228 = vmatprep.subr.mxu0 0.0
    %2229 = vmatpush1.msra.mxu0 0.0
    %2230 = vmatprep.subr.mxu0 0.0
    %2231 = vmatpush1.msra.mxu0 0.0
    %2232 = vmatprep.subr.mxu0 0.0
    %2233 = vmatpush1.msra.mxu0 0.0
    %2234 = vmatprep.mubr.f32.mxu0 0.0
    %2235 = vmatmul.mubr.f32.gmra.mrb[0].mxu0 %v2156
    %v2236 = vpop.f32.mrb[0].mxu0
    %v2237 = vadd.f32 0.0, %v2236
    %v2238 = vpop.f32.mrb[0].mxu0
    %v2239 = vadd.f32 0.0, %v2238
    %2240 = vdwg.mxu0
    %2241 = vmatprep.subr.mxu0 %v2164
    %2242 = vmatpush1.msra.mxu0 %v2162
    %2243 = vmatprep.subr.mxu0 0.0
    %2244 = vmatpush1.msra.mxu0 0.0
    %2245 = vmatprep.subr.mxu0 0.0
    %2246 = vmatpush1.msra.mxu0 0.0
    %2247 = vmatprep.subr.mxu0 0.0
    %2248 = vmatpush1.msra.mxu0 0.0
    %2249 = vmatprep.subr.mxu0 0.0
    %2250 = vmatpush1.msra.mxu0 0.0
    %2251 = vmatprep.subr.mxu0 0.0
    %2252 = vmatpush1.msra.mxu0 0.0
    %2253 = vmatprep.subr.mxu0 0.0
    %2254 = vmatpush1.msra.mxu0 0.0
    %2255 = vmatprep.subr.mxu0 0.0
    %2256 = vmatpush1.msra.mxu0 0.0
    %2257 = vmatprep.subr.mxu0 0.0
    %2258 = vmatpush1.msra.mxu0 0.0
    %2259 = vmatprep.subr.mxu0 0.0
    %2260 = vmatpush1.msra.mxu0 0.0
    %2261 = vmatprep.subr.mxu0 0.0
    %2262 = vmatpush1.msra.mxu0 0.0
    %2263 = vmatprep.subr.mxu0 0.0
    %2264 = vmatpush1.msra.mxu0 0.0
    %2265 = vmatprep.subr.mxu0 0.0
    %2266 = vmatpush1.msra.mxu0 0.0
    %2267 = vmatprep.subr.mxu0 0.0
    %2268 = vmatpush1.msra.mxu0 0.0
    %2269 = vmatprep.subr.mxu0 0.0
    %2270 = vmatpush1.msra.mxu0 0.0
    %2271 = vmatprep.subr.mxu0 0.0
    %2272 = vmatpush1.msra.mxu0 0.0
    %2273 = vmatprep.subr.mxu0 0.0
    %2274 = vmatpush1.msra.mxu0 0.0
    %2275 = vmatprep.subr.mxu0 0.0
    %2276 = vmatpush1.msra.mxu0 0.0
    %2277 = vmatprep.subr.mxu0 0.0
    %2278 = vmatpush1.msra.mxu0 0.0
    %2279 = vmatprep.subr.mxu0 0.0
    %2280 = vmatpush1.msra.mxu0 0.0
    %2281 = vmatprep.subr.mxu0 0.0
    %2282 = vmatpush1.msra.mxu0 0.0
    %2283 = vmatprep.subr.mxu0 0.0
    %2284 = vmatpush1.msra.mxu0 0.0
    %2285 = vmatprep.subr.mxu0 0.0
    %2286 = vmatpush1.msra.mxu0 0.0
    %2287 = vmatprep.subr.mxu0 0.0
    %2288 = vmatpush1.msra.mxu0 0.0
    %2289 = vmatprep.subr.mxu0 0.0
    %2290 = vmatpush1.msra.mxu0 0.0
    %2291 = vmatprep.subr.mxu0 0.0
    %2292 = vmatpush1.msra.mxu0 0.0
    %2293 = vmatprep.subr.mxu0 0.0
    %2294 = vmatpush1.msra.mxu0 0.0
    %2295 = vmatprep.subr.mxu0 0.0
    %2296 = vmatpush1.msra.mxu0 0.0
    %2297 = vmatprep.subr.mxu0 0.0
    %2298 = vmatpush1.msra.mxu0 0.0
    %2299 = vmatprep.subr.mxu0 0.0
    %2300 = vmatpush1.msra.mxu0 0.0
    %2301 = vmatprep.subr.mxu0 0.0
    %2302 = vmatpush1.msra.mxu0 0.0
    %2303 = vmatprep.subr.mxu0 0.0
    %2304 = vmatpush1.msra.mxu0 0.0
    %2305 = vmatprep.mubr.f32.mxu0 0.0
    %2306 = vmatmul.mubr.f32.gmra.mrb[0].mxu0 %v2156
    %v2307 = vpop.f32.mrb[0].mxu0
    %v2308 = vadd.f32 0.0, %v2307
    %v2309 = vpop.f32.mrb[0].mxu0
    %v2310 = vadd.f32 0.0, %v2309
    %2311 = vdwg.mxu0
    %2312 = vmatprep.subr.mxu0 %v2168
    %2313 = vmatpush1.msra.mxu0 %v2166
    %2314 = vmatprep.subr.mxu0 0.0
    %2315 = vmatpush1.msra.mxu0 0.0
    %2316 = vmatprep.subr.mxu0 0.0
    %2317 = vmatpush1.msra.mxu0 0.0
    %2318 = vmatprep.subr.mxu0 0.0
    %2319 = vmatpush1.msra.mxu0 0.0
    %2320 = vmatprep.subr.mxu0 0.0
    %2321 = vmatpush1.msra.mxu0 0.0
    %2322 = vmatprep.subr.mxu0 0.0
    %2323 = vmatpush1.msra.mxu0 0.0
    %2324 = vmatprep.subr.mxu0 0.0
    %2325 = vmatpush1.msra.mxu0 0.0
    %2326 = vmatprep.subr.mxu0 0.0
    %2327 = vmatpush1.msra.mxu0 0.0
    %2328 = vmatprep.subr.mxu0 0.0
    %2329 = vmatpush1.msra.mxu0 0.0
    %2330 = vmatprep.subr.mxu0 0.0
    %2331 = vmatpush1.msra.mxu0 0.0
    %2332 = vmatprep.subr.mxu0 0.0
    %2333 = vmatpush1.msra.mxu0 0.0
    %2334 = vmatprep.subr.mxu0 0.0
    %2335 = vmatpush1.msra.mxu0 0.0
    %2336 = vmatprep.subr.mxu0 0.0
    %2337 = vmatpush1.msra.mxu0 0.0
    %2338 = vmatprep.subr.mxu0 0.0
    %2339 = vmatpush1.msra.mxu0 0.0
    %2340 = vmatprep.subr.mxu0 0.0
    %2341 = vmatpush1.msra.mxu0 0.0
    %2342 = vmatprep.subr.mxu0 0.0
    %2343 = vmatpush1.msra.mxu0 0.0
    %2344 = vmatprep.subr.mxu0 0.0
    %2345 = vmatpush1.msra.mxu0 0.0
    %2346 = vmatprep.subr.mxu0 0.0
    %2347 = vmatpush1.msra.mxu0 0.0
    %2348 = vmatprep.subr.mxu0 0.0
    %2349 = vmatpush1.msra.mxu0 0.0
    %2350 = vmatprep.subr.mxu0 0.0
    %2351 = vmatpush1.msra.mxu0 0.0
    %2352 = vmatprep.subr.mxu0 0.0
    %2353 = vmatpush1.msra.mxu0 0.0
    %2354 = vmatprep.subr.mxu0 0.0
    %2355 = vmatpush1.msra.mxu0 0.0
    %2356 = vmatprep.subr.mxu0 0.0
    %2357 = vmatpush1.msra.mxu0 0.0
    %2358 = vmatprep.subr.mxu0 0.0
    %2359 = vmatpush1.msra.mxu0 0.0
    %2360 = vmatprep.subr.mxu0 0.0
    %2361 = vmatpush1.msra.mxu0 0.0
    %2362 = vmatprep.subr.mxu0 0.0
    %2363 = vmatpush1.msra.mxu0 0.0
    %2364 = vmatprep.subr.mxu0 0.0
    %2365 = vmatpush1.msra.mxu0 0.0
    %2366 = vmatprep.subr.mxu0 0.0
    %2367 = vmatpush1.msra.mxu0 0.0
    %2368 = vmatprep.subr.mxu0 0.0
    %2369 = vmatpush1.msra.mxu0 0.0
    %2370 = vmatprep.subr.mxu0 0.0
    %2371 = vmatpush1.msra.mxu0 0.0
    %2372 = vmatprep.subr.mxu0 0.0
    %2373 = vmatpush1.msra.mxu0 0.0
    %2374 = vmatprep.subr.mxu0 0.0
    %2375 = vmatpush1.msra.mxu0 0.0
    %2376 = vmatprep.mubr.f32.mxu0 0.0
    %2377 = vmatmul.mubr.f32.gmra.mrb[0].mxu0 %v2156
    %v2378 = vpop.f32.mrb[0].mxu0
    %v2379 = vadd.f32 0.0, %v2378
    %v2380 = vpop.f32.mrb[0].mxu0
    %v2381 = vadd.f32 0.0, %v2380
    %2382 = vdwg.mxu0
    %v2383 = vadd.f32 %v2116, %v2237
    %v2384 = vadd.f32 %v2117, %v2239
    %v2385 = vadd.f32 %v2118, %v2308
    %v2386 = vadd.f32 %v2119, %v2310
    %v2387 = vadd.f32 %v2120, %v2379
    %v2388 = vadd.f32 %v2121, %v2381
    %v2389 = vld [vmem:[%s2] sm:$0x3f]
    %v2391 = vlaneseq
    %v2392 = vshrl.u32 %v2391, 7
    %v2393 = vsub.s32 0, %v2392
    %v2394 = vrot.slane %v2389, %v2393
    %v2395 = vlaneseq
    %v2396 = vshrl.u32 %v2395, 7
    %v2397 = vsub.s32 1, %v2396
    %v2398 = vrot.slane %v2389, %v2397
    %v2399 = vlaneseq
    %v2400 = vshrl.u32 %v2399, 7
    %v2401 = vsub.s32 2, %v2400
    %v2402 = vrot.slane %v2389, %v2401
    %v2403 = vlaneseq
    %v2404 = vshrl.u32 %v2403, 7
    %v2405 = vsub.s32 3, %v2404
    %v2406 = vrot.slane %v2389, %v2405
    %v2407 = vlaneseq
    %v2408 = vshrl.u32 %v2407, 7
    %v2409 = vsub.s32 4, %v2408
    %v2410 = vrot.slane %v2389, %v2409
    %v2411 = vlaneseq
    %v2412 = vshrl.u32 %v2411, 7
    %v2413 = vsub.s32 5, %v2412
    %v2414 = vrot.slane %v2389, %v2413
    %v2421 = vmul.f32 %v2383, %v2394
    %v2422 = vmul.f32 %v2384, %v2398
    %v2423 = vmul.f32 %v2385, %v2402
    %v2424 = vmul.f32 %v2386, %v2406
    %v2425 = vmul.f32 %v2387, %v2410
    %v2426 = vmul.f32 %v2388, %v2414
    %v2427 = vadd.f32 %v2421, %v2422
    %v2428 = vadd.f32 %v2427, %v2423
    %v2429 = vadd.f32 %v2428, %v2424
    %v2430 = vadd.f32 %v2429, %v2425
    %v2431 = vadd.f32 %v2430, %v2426
    %2432 = vadd.xlane.f32.xlu0 %v2431
    %v2433 = vpop.xlane.xlu0 %2432
    %v2434 = vmul.f32 %v2421, %v2383
    %v2435 = vmul.f32 %v2422, %v2384
    %v2436 = vmul.f32 %v2423, %v2385
    %v2437 = vmul.f32 %v2424, %v2386
    %v2438 = vmul.f32 %v2425, %v2387
    %v2439 = vmul.f32 %v2426, %v2388
    %v2440 = vadd.f32 %v2434, %v2435
    %v2441 = vadd.f32 %v2440, %v2436
    %v2442 = vadd.f32 %v2441, %v2437
    %v2443 = vadd.f32 %v2442, %v2438
    %v2444 = vadd.f32 %v2443, %v2439
    %2445 = vadd.xlane.f32.xlu0 %v2444
    %v2446 = vpop.xlane.xlu0 %2445
    %v2447 = vmul.f32 %v2433, 0.001953125
    %v2448 = vmul.f32 %v2446, 0.001953125
    %v2449 = vmul.f32 %v2447, %v2447
    %v2450 = vsub.f32 %v2448, %v2449
    %v2451 = vadd.f32 %v2450, 1e-05
    %v2452 = vrsqrt.pop %v2451
    %v2453 = vld [vmem:[%s3] sm:$0xff]
    %v2454 = vmul.f32 %v2452, %v2453
    %v2455 = vmul.f32 %v2447, %v2454
    %2457 = vrot.lane.b32.xlu0 %v2455, 1
    %v2458 = vpop.permute.xlu0 %2457
    %v2460 = vsub.f32 %v2453, %v2458
    %2462 = vset.pattern.permute.xlu0 0
    %2463 = vperm.xlu0 %2462, %v2454
    %v2464 = vpop.permute.xlu0 %2463
    %v2466 = vmul.f32 %v2383, %v2464
    %v2467 = vmul.f32 %v2384, %v2464
    %v2468 = vmul.f32 %v2385, %v2464
    %v2469 = vmul.f32 %v2386, %v2464
    %v2470 = vmul.f32 %v2387, %v2464
    %v2471 = vmul.f32 %v2388, %v2464
    %2473 = vset.pattern.permute.xlu0 1
    %2474 = vperm.xlu0 %2473, %v2460
    %v2475 = vpop.permute.xlu0 %2474
    %v2477 = vadd.f32 %v2466, %v2475
    %v2478 = vadd.f32 %v2467, %v2475
    %v2479 = vadd.f32 %v2468, %v2475
    %v2480 = vadd.f32 %v2469, %v2475
    %v2481 = vadd.f32 %v2470, %v2475
    %v2482 = vadd.f32 %v2471, %v2475
    %2483 = vst [vmem:[#allocation5] sm:$0xff] %v2477
    %2484 = vst [vmem:[#allocation5 + $0x8] sm:$0xff] %v2478
    %2485 = vst [vmem:[#allocation5 + $0x10] sm:$0xff] %v2479
    %2486 = vst [vmem:[#allocation5 + $0x18] sm:$0xff] %v2480
    %2487 = vst [vmem:[#allocation5 + $0x20] sm:$0xff] %v2481
    %2488 = vst [vmem:[#allocation5 + $0x28] sm:$0xff] %v2482
    // Predicated region
    $region22: #{tpu_custom_call.1} parent=1 // pred_check
      _
    $region23: #{tpu_custom_call.1} parent=1 // pred_check_branch
      %2490 = sbr.rel (0) target = $region25
    $region24: #{tpu_custom_call.1} parent=1 // pred_region
      %s2492 = ssub.s32 768, 768
      %2493 = vsyncadd [#allocation4], %s2492
      %s2495 = sshll.u32 [#allocation5], 4
      %s2496 = int_to_ptr.vmem [resolvable:$true] %s2495
      %2498 = dma.vmem_to_hbm [thread:$0]  %s2496, 768, %s4, [#allocation4]
    $region25: #{tpu_custom_call.1} parent=1 // pred_fallthru
      _
    // Predicated region
    $region26: #{tpu_custom_call.1} parent=1 // pred_check
      _
    $region27: #{tpu_custom_call.1} parent=1 // pred_check_branch
      %2500 = sbr.rel (0) target = $region29
    $region28: #{tpu_custom_call.1} parent=1 // pred_region
      %2501 = dma.done [#allocation4], 768
    $region29: #{tpu_custom_call.1} parent=1 // pred_fallthru
      _
    %2502 = vsyncpa [#allocation3], 1
    %2503 = vsyncpa [#allocation4], 1

</llo_original>
